<compile_context>
chip_gen: v6e
topology: v6e:2x2x1
jax: 0.10.0
libtpu: 0.0.40
codegen_flags: <defaults>
</compile_context>

<pallas_src>
import jax
import jax.numpy as jnp
from jax.experimental import pallas as pl
from jax.experimental.pallas import tpu as pltpu


def _vmem_limit_bytes():
    try:
        cap = pltpu.get_tpu_info().vmem_capacity_bytes
    except Exception:
        cap = 64 * 1024 * 1024
    return min(int(cap * 4 // 5), 100 * 1024 * 1024)


def multi_head_attention(q, k, v, params, num_heads, *, q_tile=128, kv_tile=512,
                         mxu_dtype=jnp.bfloat16):
    """Forward pass matching MultiHeadAttention.forward(query, key, value, mask=None)."""
    B, S, D = q.shape
    assert k.shape == (B, S, D) and v.shape == (B, S, D)
    H = num_heads
    assert D % H == 0, "d_model must be divisible by num_heads"
    hd = D // H
    out_dtype = q.dtype
    cdt = jnp.dtype(mxu_dtype)          # MXU operand dtype (bf16 default, f32 optional)
    f32 = jnp.float32
    scale = 1.0 / float(hd) ** 0.5
    use_approx_recip = (cdt == jnp.bfloat16)

    # ---------------- host-side (one-time) weight prep: head-major layouts -----------
    def per_head_in(w):
        # torch (out, in) -> transposed (in, out) -> (H, D_in, hd); head h = columns
        # [h*hd:(h+1)*hd] of W.T, so x @ per_head_in(w)[h] is head h of the projection.
        return jnp.transpose(w.astype(f32).T.reshape(D, H, hd), (1, 0, 2))

    wq_h = (per_head_in(params["wq"]) * scale).astype(cdt)                 # (H, D, hd)
    bq_h = (params["bq"].astype(f32) * scale).reshape(H, 1, hd)            # (H, 1, hd) f32
    wkv_h = jnp.stack([per_head_in(params["wk"]),
                       per_head_in(params["wv"])]).astype(cdt)             # (2, H, D, hd)
    bkv_h = jnp.stack([params["bk"].astype(f32).reshape(H, 1, hd),
                       params["bv"].astype(f32).reshape(H, 1, hd)])        # (2, H, 1, hd) f32
    wo_h = params["wo"].astype(f32).T.reshape(H, hd, D).astype(cdt)        # (H, hd, D)
    bo = params["bo"].astype(f32).reshape(1, D)                            # (1, D) f32

    q_in = q.astype(cdt)
    k_in = k.astype(cdt)
    v_in = v.astype(cdt)

    vmem_limit = _vmem_limit_bytes()

    # ---------------- pass 1: K/V projection -> head-major (2, B, H, S, hd) ----------
    sk = S if S <= kv_tile else kv_tile          # kv_tile is a multiple of 8
    n_sk = pl.cdiv(S, sk)

    def kv_proj_kernel(k_ref, v_ref, wkv_ref, bkv_ref, khv_ref):
        for i, x_ref in enumerate((k_ref, v_ref)):      # 0 = key, 1 = value
            x = x_ref[0]                                 # (sk, D)
            for h in range(H):
                ph = jnp.dot(x, wkv_ref[i, h],
                             preferred_element_type=jnp.float32) + bkv_ref[i, h]
                khv_ref[i, 0, h] = ph.astype(cdt)        # (sk, hd) head-major slab

    khv = pl.pallas_call(
        kv_proj_kernel,
        out_shape=jax.ShapeDtypeStruct((2, B, H, S, hd), cdt),
        grid=(B, n_sk),
        in_specs=[
            pl.BlockSpec((1, sk, D), lambda b, s: (b, s, 0)),              # key tile
            pl.BlockSpec((1, sk, D), lambda b, s: (b, s, 0)),              # value tile
            pl.BlockSpec((2, H, D, hd), lambda b, s: (0, 0, 0, 0)),        # wkv (resident)
            pl.BlockSpec((2, H, 1, hd), lambda b, s: (0, 0, 0, 0)),        # bkv (resident)
        ],
        out_specs=pl.BlockSpec((2, 1, H, sk, hd), lambda b, s: (0, b, 0, s, 0)),
        compiler_params=pltpu.CompilerParams(
            dimension_semantics=("parallel", "parallel"),
            vmem_limit_bytes=vmem_limit,
        ),
    )(k_in, v_in, wkv_h, bkv_h)

    # ---------------- pass 2: per-(batch, q-tile, head) attention + fused out proj ----
    tq = S if S <= q_tile else q_tile            # q_tile is a multiple of 8
    n_qt = pl.cdiv(S, tq)

    def mha_kernel(q_ref, khv_ref, wq_ref, bq_ref, wo_ref, bo_ref, o_ref, acc_ref):
        h = pl.program_id(2)

        @pl.when(h == 0)
        def _init():
            # start the head accumulation from the output-projection bias
            acc_ref[...] = jnp.broadcast_to(bo_ref[...], acc_ref.shape)

        # Q projection for this head (scale already folded into wq/bq).
        qh = (jnp.dot(q_ref[0], wq_ref[0], preferred_element_type=jnp.float32)
              + bq_ref[0]).astype(cdt)                                     # (tq, hd)
        kh = khv_ref[0, 0, 0]                                              # (S, hd)
        vh = khv_ref[1, 0, 0]                                              # (S, hd)

        # scores = Q K^T (contract last axes: MXU handles the transposed operand).
        s = jax.lax.dot_general(qh, kh, (((1,), (1,)), ((), ())),
                                preferred_element_type=jnp.float32)        # (tq, S) f32
        m = jnp.max(s, axis=-1, keepdims=True)
        p = jnp.exp(s - m)
        denom = jnp.sum(p, axis=-1, keepdims=True)                         # (tq, 1) f32
        ctx = jnp.dot(p.astype(cdt), vh,
                      preferred_element_type=jnp.float32)                  # (tq, hd) f32
        if use_approx_recip:
            ctx = ctx * pl.reciprocal(denom, approx=True)                  # EUP slot
        else:
            ctx = ctx / denom
        # head-accumulated output projection: out += ctx_h @ wo_h
        acc_ref[...] += jnp.dot(ctx.astype(cdt), wo_ref[0],
                                preferred_element_type=jnp.float32)        # (tq, D)

        @pl.when(h == H - 1)
        def _finalize():
            o_ref[0] = acc_ref[...].astype(o_ref.dtype)

    return pl.pallas_call(
        mha_kernel,
        out_shape=jax.ShapeDtypeStruct((B, S, D), out_dtype),
        grid=(B, n_qt, H),
        in_specs=[
            pl.BlockSpec((1, tq, D), lambda b, t, h: (b, t, 0)),            # q tile (revisited over h)
            pl.BlockSpec((2, 1, 1, S, hd), lambda b, t, h: (0, b, h, 0, 0)),# K/V for head h
            pl.BlockSpec((1, D, hd), lambda b, t, h: (h, 0, 0)),            # wq head h
            pl.BlockSpec((1, 1, hd), lambda b, t, h: (h, 0, 0)),            # bq head h
            pl.BlockSpec((1, hd, D), lambda b, t, h: (h, 0, 0)),            # wo head h
            pl.BlockSpec((1, D), lambda b, t, h: (0, 0)),                   # bo (resident)
        ],
        out_specs=pl.BlockSpec((1, tq, D), lambda b, t, h: (b, t, 0)),
        scratch_shapes=[pltpu.VMEM((tq, D), jnp.float32)],                  # head accumulator
        compiler_params=pltpu.CompilerParams(
            # batch and query-tile axes megacore-parallel; head axis carries the accumulator
            dimension_semantics=("parallel", "parallel", "arbitrary"),
            vmem_limit_bytes=vmem_limit,
        ),
    )(q_in, khv, wq_h, bq_h, wo_h, bo)


def reference_mha(q, k, v, params, num_heads):
    """Pure-JAX reference matching the PyTorch forward (mask=None)."""
    B, S, D = q.shape
    hd = D // num_heads

    def lin(x, w, b):
        return x @ w.T + b

    Q = lin(q, params["wq"], params["bq"]).reshape(B, S, num_heads, hd).transpose(0, 2, 1, 3)
    K = lin(k, params["wk"], params["bk"]).reshape(B, S, num_heads, hd).transpose(0, 2, 1, 3)
    V = lin(v, params["wv"], params["bv"]).reshape(B, S, num_heads, hd).transpose(0, 2, 1, 3)

    scores = jnp.einsum("bhqd,bhkd->bhqk", Q, K) / jnp.sqrt(jnp.float32(hd))
    attn = jax.nn.softmax(scores, axis=-1)
    out = jnp.einsum("bhqk,bhkd->bhqd", attn, V).transpose(0, 2, 1, 3).reshape(B, S, D)
    return lin(out, params["wo"], params["bo"])


def init_params(key, d_model):
    ks = jax.random.split(key, 8)
    bound = 1.0 / float(d_model) ** 0.5   # torch nn.Linear default init range
    u = lambda kk, shape: jax.random.uniform(kk, shape, jnp.float32, -bound, bound)
    return {
        "wq": u(ks[0], (d_model, d_model)), "bq": u(ks[1], (d_model,)),
        "wk": u(ks[2], (d_model, d_model)), "bk": u(ks[3], (d_model,)),
        "wv": u(ks[4], (d_model, d_model)), "bv": u(ks[5], (d_model,)),
        "wo": u(ks[6], (d_model, d_model)), "bo": u(ks[7], (d_model,)),
    }


if __name__ == "__main__":
    # Small but lane-dense shapes: d_model multiple of 128, seq multiple of 8.
    B, S, D, H = 2, 16, 128, 4

    key_p, key_q, key_k, key_v = jax.random.split(jax.random.PRNGKey(0), 4)
    params = init_params(key_p, D)
    q = jax.random.normal(key_q, (B, S, D), jnp.float32)
    k = jax.random.normal(key_k, (B, S, D), jnp.float32)
    v = jax.random.normal(key_v, (B, S, D), jnp.float32)

    ref = reference_mha(q, k, v, params, H)

    # default path: bf16 MXU operands, f32 accumulation + f32 softmax
    out_bf16 = jax.block_until_ready(multi_head_attention(q, k, v, params, H))
    assert out_bf16.shape == (B, S, D)
    assert jnp.allclose(out_bf16, ref, atol=5e-2, rtol=5e-2), "bf16 kernel mismatch vs reference"

    # explicit f32 path (exact softmax division), tighter tolerance
    out_f32 = jax.block_until_ready(
        multi_head_attention(q, k, v, params, H, mxu_dtype=jnp.float32))
    assert out_f32.shape == (B, S, D)
    assert jnp.allclose(out_f32, ref, atol=5e-3, rtol=5e-3), "f32 kernel mismatch vs reference"

    print("KERNEL_OK")
</pallas_src>

<mosaic_0001>
module attributes {stable_mosaic.version = 11 : i64} {
  func.func @kv_proj_kernel(%arg0: i32, %arg1: i32, %arg2: memref<1x16x128xbf16, #tpu.memory_space<vmem>>, %arg3: memref<1x16x128xbf16, #tpu.memory_space<vmem>>, %arg4: memref<2x4x128x32xbf16, #tpu.memory_space<vmem>>, %arg5: memref<2x4x1x32xf32, #tpu.memory_space<vmem>>, %arg6: memref<2x1x4x16x32xbf16, #tpu.memory_space<vmem>>) attributes {dimension_semantics = [#tpu.dimension_semantics<parallel>, #tpu.dimension_semantics<parallel>], iteration_bounds = array<i64: 2, 1>, scalar_prefetch = 0 : i64, scratch_operands = 0 : i64, tpu.core_type = #tpu.core_type<tc>, window_params = [{transform_indices = @transform_0, window_bounds = array<i64: 1, 16, 128>}, {transform_indices = @transform_1, window_bounds = array<i64: 1, 16, 128>}, {pipeline_mode = #tpu.pipeline_mode<synchronous>, transform_indices = @transform_2, window_bounds = array<i64: 2, 4, 128, 32>}, {pipeline_mode = #tpu.pipeline_mode<synchronous>, transform_indices = @transform_3, window_bounds = array<i64: 2, 4, 1, 32>}, {transform_indices = @transform_4, window_bounds = array<i64: 2, 1, 4, 16, 32>}]} {
    %c0 = arith.constant 0 : index
    %c0_0 = arith.constant 0 : index
    %c0_1 = arith.constant 0 : index
    %0 = vector.load %arg2[%c0, %c0_0, %c0_1] : memref<1x16x128xbf16, #tpu.memory_space<vmem>>, vector<1x16x128xbf16>
    %1 = vector.shape_cast %0 : vector<1x16x128xbf16> to vector<16x128xbf16>
    %c0_2 = arith.constant 0 : index
    %c0_3 = arith.constant 0 : index
    %c0_4 = arith.constant 0 : index
    %c0_5 = arith.constant 0 : index
    %2 = vector.load %arg4[%c0_2, %c0_3, %c0_4, %c0_5] : memref<2x4x128x32xbf16, #tpu.memory_space<vmem>>, vector<1x1x128x32xbf16>
    %3 = vector.shape_cast %2 : vector<1x1x128x32xbf16> to vector<128x32xbf16>
    %cst = arith.constant dense<0.000000e+00> : vector<16x32xf32>
    %4 = tpu.matmul %1, %3, %cst {dimension_numbers = #tpu.dot_dimension_numbers<[1], [0], [0], [1], [0, 0, 1, 1], [], []>} : vector<16x128xbf16>, vector<128x32xbf16>, vector<16x32xf32> -> vector<16x32xf32>
    %c0_6 = arith.constant 0 : index
    %c0_7 = arith.constant 0 : index
    %c0_8 = arith.constant 0 : index
    %c0_9 = arith.constant 0 : index
    %5 = vector.load %arg5[%c0_6, %c0_7, %c0_8, %c0_9] : memref<2x4x1x32xf32, #tpu.memory_space<vmem>>, vector<1x1x1x32xf32>
    %6 = vector.shape_cast %5 : vector<1x1x1x32xf32> to vector<1x32xf32>
    %7 = vector.broadcast %6 : vector<1x32xf32> to vector<16x32xf32>
    %8 = arith.addf %4, %7 : vector<16x32xf32>
    %9 = arith.truncf %8 : vector<16x32xf32> to vector<16x32xbf16>
    %c0_10 = arith.constant 0 : index
    %c0_11 = arith.constant 0 : index
    %c0_12 = arith.constant 0 : index
    %c0_13 = arith.constant 0 : index
    %c0_14 = arith.constant 0 : index
    %10 = vector.load %arg6[%c0_10, %c0_11, %c0_12, %c0_13, %c0_14] : memref<2x1x4x16x32xbf16, #tpu.memory_space<vmem>>, vector<1x1x1x16x32xbf16>
    %11 = vector.shape_cast %10 : vector<1x1x1x16x32xbf16> to vector<16x32xbf16>
    %12 = vector.shape_cast %9 : vector<16x32xbf16> to vector<1x1x1x16x32xbf16>
    tpu.vector_store %arg6[%c0_10, %c0_11, %c0_12, %c0_13, %c0_14], %12 {strides = array<i32>} : memref<2x1x4x16x32xbf16, #tpu.memory_space<vmem>>, vector<1x1x1x16x32xbf16>,
    %c0_15 = arith.constant 0 : index
    %c1 = arith.constant 1 : index
    %c0_16 = arith.constant 0 : index
    %c0_17 = arith.constant 0 : index
    %13 = vector.load %arg4[%c0_15, %c1, %c0_16, %c0_17] : memref<2x4x128x32xbf16, #tpu.memory_space<vmem>>, vector<1x1x128x32xbf16>
    %14 = vector.shape_cast %13 : vector<1x1x128x32xbf16> to vector<128x32xbf16>
    %cst_18 = arith.constant dense<0.000000e+00> : vector<16x32xf32>
    %15 = tpu.matmul %1, %14, %cst_18 {dimension_numbers = #tpu.dot_dimension_numbers<[1], [0], [0], [1], [0, 0, 1, 1], [], []>} : vector<16x128xbf16>, vector<128x32xbf16>, vector<16x32xf32> -> vector<16x32xf32>
    %c0_19 = arith.constant 0 : index
    %c1_20 = arith.constant 1 : index
    %c0_21 = arith.constant 0 : index
    %c0_22 = arith.constant 0 : index
    %16 = vector.load %arg5[%c0_19, %c1_20, %c0_21, %c0_22] : memref<2x4x1x32xf32, #tpu.memory_space<vmem>>, vector<1x1x1x32xf32>
    %17 = vector.shape_cast %16 : vector<1x1x1x32xf32> to vector<1x32xf32>
    %18 = vector.broadcast %17 : vector<1x32xf32> to vector<16x32xf32>
    %19 = arith.addf %15, %18 : vector<16x32xf32>
    %20 = arith.truncf %19 : vector<16x32xf32> to vector<16x32xbf16>
    %c0_23 = arith.constant 0 : index
    %c0_24 = arith.constant 0 : index
    %c1_25 = arith.constant 1 : index
    %c0_26 = arith.constant 0 : index
    %c0_27 = arith.constant 0 : index
    %21 = vector.load %arg6[%c0_23, %c0_24, %c1_25, %c0_26, %c0_27] : memref<2x1x4x16x32xbf16, #tpu.memory_space<vmem>>, vector<1x1x1x16x32xbf16>
    %22 = vector.shape_cast %21 : vector<1x1x1x16x32xbf16> to vector<16x32xbf16>
    %23 = vector.shape_cast %20 : vector<16x32xbf16> to vector<1x1x1x16x32xbf16>
    tpu.vector_store %arg6[%c0_23, %c0_24, %c1_25, %c0_26, %c0_27], %23 {strides = array<i32>} : memref<2x1x4x16x32xbf16, #tpu.memory_space<vmem>>, vector<1x1x1x16x32xbf16>,
    %c0_28 = arith.constant 0 : index
    %c2 = arith.constant 2 : index
    %c0_29 = arith.constant 0 : index
    %c0_30 = arith.constant 0 : index
    %24 = vector.load %arg4[%c0_28, %c2, %c0_29, %c0_30] : memref<2x4x128x32xbf16, #tpu.memory_space<vmem>>, vector<1x1x128x32xbf16>
    %25 = vector.shape_cast %24 : vector<1x1x128x32xbf16> to vector<128x32xbf16>
    %cst_31 = arith.constant dense<0.000000e+00> : vector<16x32xf32>
    %26 = tpu.matmul %1, %25, %cst_31 {dimension_numbers = #tpu.dot_dimension_numbers<[1], [0], [0], [1], [0, 0, 1, 1], [], []>} : vector<16x128xbf16>, vector<128x32xbf16>, vector<16x32xf32> -> vector<16x32xf32>
    %c0_32 = arith.constant 0 : index
    %c2_33 = arith.constant 2 : index
    %c0_34 = arith.constant 0 : index
    %c0_35 = arith.constant 0 : index
    %27 = vector.load %arg5[%c0_32, %c2_33, %c0_34, %c0_35] : memref<2x4x1x32xf32, #tpu.memory_space<vmem>>, vector<1x1x1x32xf32>
    %28 = vector.shape_cast %27 : vector<1x1x1x32xf32> to vector<1x32xf32>
    %29 = vector.broadcast %28 : vector<1x32xf32> to vector<16x32xf32>
    %30 = arith.addf %26, %29 : vector<16x32xf32>
    %31 = arith.truncf %30 : vector<16x32xf32> to vector<16x32xbf16>
    %c0_36 = arith.constant 0 : index
    %c0_37 = arith.constant 0 : index
    %c2_38 = arith.constant 2 : index
    %c0_39 = arith.constant 0 : index
    %c0_40 = arith.constant 0 : index
    %32 = vector.load %arg6[%c0_36, %c0_37, %c2_38, %c0_39, %c0_40] : memref<2x1x4x16x32xbf16, #tpu.memory_space<vmem>>, vector<1x1x1x16x32xbf16>
    %33 = vector.shape_cast %32 : vector<1x1x1x16x32xbf16> to vector<16x32xbf16>
    %34 = vector.shape_cast %31 : vector<16x32xbf16> to vector<1x1x1x16x32xbf16>
    tpu.vector_store %arg6[%c0_36, %c0_37, %c2_38, %c0_39, %c0_40], %34 {strides = array<i32>} : memref<2x1x4x16x32xbf16, #tpu.memory_space<vmem>>, vector<1x1x1x16x32xbf16>,
    %c0_41 = arith.constant 0 : index
    %c3 = arith.constant 3 : index
    %c0_42 = arith.constant 0 : index
    %c0_43 = arith.constant 0 : index
    %35 = vector.load %arg4[%c0_41, %c3, %c0_42, %c0_43] : memref<2x4x128x32xbf16, #tpu.memory_space<vmem>>, vector<1x1x128x32xbf16>
    %36 = vector.shape_cast %35 : vector<1x1x128x32xbf16> to vector<128x32xbf16>
    %cst_44 = arith.constant dense<0.000000e+00> : vector<16x32xf32>
    %37 = tpu.matmul %1, %36, %cst_44 {dimension_numbers = #tpu.dot_dimension_numbers<[1], [0], [0], [1], [0, 0, 1, 1], [], []>} : vector<16x128xbf16>, vector<128x32xbf16>, vector<16x32xf32> -> vector<16x32xf32>
    %c0_45 = arith.constant 0 : index
    %c3_46 = arith.constant 3 : index
    %c0_47 = arith.constant 0 : index
    %c0_48 = arith.constant 0 : index
    %38 = vector.load %arg5[%c0_45, %c3_46, %c0_47, %c0_48] : memref<2x4x1x32xf32, #tpu.memory_space<vmem>>, vector<1x1x1x32xf32>
    %39 = vector.shape_cast %38 : vector<1x1x1x32xf32> to vector<1x32xf32>
    %40 = vector.broadcast %39 : vector<1x32xf32> to vector<16x32xf32>
    %41 = arith.addf %37, %40 : vector<16x32xf32>
    %42 = arith.truncf %41 : vector<16x32xf32> to vector<16x32xbf16>
    %c0_49 = arith.constant 0 : index
    %c0_50 = arith.constant 0 : index
    %c3_51 = arith.constant 3 : index
    %c0_52 = arith.constant 0 : index
    %c0_53 = arith.constant 0 : index
    %43 = vector.load %arg6[%c0_49, %c0_50, %c3_51, %c0_52, %c0_53] : memref<2x1x4x16x32xbf16, #tpu.memory_space<vmem>>, vector<1x1x1x16x32xbf16>
    %44 = vector.shape_cast %43 : vector<1x1x1x16x32xbf16> to vector<16x32xbf16>
    %45 = vector.shape_cast %42 : vector<16x32xbf16> to vector<1x1x1x16x32xbf16>
    tpu.vector_store %arg6[%c0_49, %c0_50, %c3_51, %c0_52, %c0_53], %45 {strides = array<i32>} : memref<2x1x4x16x32xbf16, #tpu.memory_space<vmem>>, vector<1x1x1x16x32xbf16>,
    %c0_54 = arith.constant 0 : index
    %c0_55 = arith.constant 0 : index
    %c0_56 = arith.constant 0 : index
    %46 = vector.load %arg3[%c0_54, %c0_55, %c0_56] : memref<1x16x128xbf16, #tpu.memory_space<vmem>>, vector<1x16x128xbf16>
    %47 = vector.shape_cast %46 : vector<1x16x128xbf16> to vector<16x128xbf16>
    %c1_57 = arith.constant 1 : index
    %c0_58 = arith.constant 0 : index
    %c0_59 = arith.constant 0 : index
    %c0_60 = arith.constant 0 : index
    %48 = vector.load %arg4[%c1_57, %c0_58, %c0_59, %c0_60] : memref<2x4x128x32xbf16, #tpu.memory_space<vmem>>, vector<1x1x128x32xbf16>
    %49 = vector.shape_cast %48 : vector<1x1x128x32xbf16> to vector<128x32xbf16>
    %cst_61 = arith.constant dense<0.000000e+00> : vector<16x32xf32>
    %50 = tpu.matmul %47, %49, %cst_61 {dimension_numbers = #tpu.dot_dimension_numbers<[1], [0], [0], [1], [0, 0, 1, 1], [], []>} : vector<16x128xbf16>, vector<128x32xbf16>, vector<16x32xf32> -> vector<16x32xf32>
    %c1_62 = arith.constant 1 : index
    %c0_63 = arith.constant 0 : index
    %c0_64 = arith.constant 0 : index
    %c0_65 = arith.constant 0 : index
    %51 = vector.load %arg5[%c1_62, %c0_63, %c0_64, %c0_65] : memref<2x4x1x32xf32, #tpu.memory_space<vmem>>, vector<1x1x1x32xf32>
    %52 = vector.shape_cast %51 : vector<1x1x1x32xf32> to vector<1x32xf32>
    %53 = vector.broadcast %52 : vector<1x32xf32> to vector<16x32xf32>
    %54 = arith.addf %50, %53 : vector<16x32xf32>
    %55 = arith.truncf %54 : vector<16x32xf32> to vector<16x32xbf16>
    %c1_66 = arith.constant 1 : index
    %c0_67 = arith.constant 0 : index
    %c0_68 = arith.constant 0 : index
    %c0_69 = arith.constant 0 : index
    %c0_70 = arith.constant 0 : index
    %56 = vector.load %arg6[%c1_66, %c0_67, %c0_68, %c0_69, %c0_70] : memref<2x1x4x16x32xbf16, #tpu.memory_space<vmem>>, vector<1x1x1x16x32xbf16>
    %57 = vector.shape_cast %56 : vector<1x1x1x16x32xbf16> to vector<16x32xbf16>
    %58 = vector.shape_cast %55 : vector<16x32xbf16> to vector<1x1x1x16x32xbf16>
    tpu.vector_store %arg6[%c1_66, %c0_67, %c0_68, %c0_69, %c0_70], %58 {strides = array<i32>} : memref<2x1x4x16x32xbf16, #tpu.memory_space<vmem>>, vector<1x1x1x16x32xbf16>,
    %c1_71 = arith.constant 1 : index
    %c1_72 = arith.constant 1 : index
    %c0_73 = arith.constant 0 : index
    %c0_74 = arith.constant 0 : index
    %59 = vector.load %arg4[%c1_71, %c1_72, %c0_73, %c0_74] : memref<2x4x128x32xbf16, #tpu.memory_space<vmem>>, vector<1x1x128x32xbf16>
    %60 = vector.shape_cast %59 : vector<1x1x128x32xbf16> to vector<128x32xbf16>
    %cst_75 = arith.constant dense<0.000000e+00> : vector<16x32xf32>
    %61 = tpu.matmul %47, %60, %cst_75 {dimension_numbers = #tpu.dot_dimension_numbers<[1], [0], [0], [1], [0, 0, 1, 1], [], []>} : vector<16x128xbf16>, vector<128x32xbf16>, vector<16x32xf32> -> vector<16x32xf32>
    %c1_76 = arith.constant 1 : index
    %c1_77 = arith.constant 1 : index
    %c0_78 = arith.constant 0 : index
    %c0_79 = arith.constant 0 : index
    %62 = vector.load %arg5[%c1_76, %c1_77, %c0_78, %c0_79] : memref<2x4x1x32xf32, #tpu.memory_space<vmem>>, vector<1x1x1x32xf32>
    %63 = vector.shape_cast %62 : vector<1x1x1x32xf32> to vector<1x32xf32>
    %64 = vector.broadcast %63 : vector<1x32xf32> to vector<16x32xf32>
    %65 = arith.addf %61, %64 : vector<16x32xf32>
    %66 = arith.truncf %65 : vector<16x32xf32> to vector<16x32xbf16>
    %c1_80 = arith.constant 1 : index
    %c0_81 = arith.constant 0 : index
    %c1_82 = arith.constant 1 : index
    %c0_83 = arith.constant 0 : index
    %c0_84 = arith.constant 0 : index
    %67 = vector.load %arg6[%c1_80, %c0_81, %c1_82, %c0_83, %c0_84] : memref<2x1x4x16x32xbf16, #tpu.memory_space<vmem>>, vector<1x1x1x16x32xbf16>
    %68 = vector.shape_cast %67 : vector<1x1x1x16x32xbf16> to vector<16x32xbf16>
    %69 = vector.shape_cast %66 : vector<16x32xbf16> to vector<1x1x1x16x32xbf16>
    tpu.vector_store %arg6[%c1_80, %c0_81, %c1_82, %c0_83, %c0_84], %69 {strides = array<i32>} : memref<2x1x4x16x32xbf16, #tpu.memory_space<vmem>>, vector<1x1x1x16x32xbf16>,
    %c1_85 = arith.constant 1 : index
    %c2_86 = arith.constant 2 : index
    %c0_87 = arith.constant 0 : index
    %c0_88 = arith.constant 0 : index
    %70 = vector.load %arg4[%c1_85, %c2_86, %c0_87, %c0_88] : memref<2x4x128x32xbf16, #tpu.memory_space<vmem>>, vector<1x1x128x32xbf16>
    %71 = vector.shape_cast %70 : vector<1x1x128x32xbf16> to vector<128x32xbf16>
    %cst_89 = arith.constant dense<0.000000e+00> : vector<16x32xf32>
    %72 = tpu.matmul %47, %71, %cst_89 {dimension_numbers = #tpu.dot_dimension_numbers<[1], [0], [0], [1], [0, 0, 1, 1], [], []>} : vector<16x128xbf16>, vector<128x32xbf16>, vector<16x32xf32> -> vector<16x32xf32>
    %c1_90 = arith.constant 1 : index
    %c2_91 = arith.constant 2 : index
    %c0_92 = arith.constant 0 : index
    %c0_93 = arith.constant 0 : index
    %73 = vector.load %arg5[%c1_90, %c2_91, %c0_92, %c0_93] : memref<2x4x1x32xf32, #tpu.memory_space<vmem>>, vector<1x1x1x32xf32>
    %74 = vector.shape_cast %73 : vector<1x1x1x32xf32> to vector<1x32xf32>
    %75 = vector.broadcast %74 : vector<1x32xf32> to vector<16x32xf32>
    %76 = arith.addf %72, %75 : vector<16x32xf32>
    %77 = arith.truncf %76 : vector<16x32xf32> to vector<16x32xbf16>
    %c1_94 = arith.constant 1 : index
    %c0_95 = arith.constant 0 : index
    %c2_96 = arith.constant 2 : index
    %c0_97 = arith.constant 0 : index
    %c0_98 = arith.constant 0 : index
    %78 = vector.load %arg6[%c1_94, %c0_95, %c2_96, %c0_97, %c0_98] : memref<2x1x4x16x32xbf16, #tpu.memory_space<vmem>>, vector<1x1x1x16x32xbf16>
    %79 = vector.shape_cast %78 : vector<1x1x1x16x32xbf16> to vector<16x32xbf16>
    %80 = vector.shape_cast %77 : vector<16x32xbf16> to vector<1x1x1x16x32xbf16>
    tpu.vector_store %arg6[%c1_94, %c0_95, %c2_96, %c0_97, %c0_98], %80 {strides = array<i32>} : memref<2x1x4x16x32xbf16, #tpu.memory_space<vmem>>, vector<1x1x1x16x32xbf16>,
    %c1_99 = arith.constant 1 : index
    %c3_100 = arith.constant 3 : index
    %c0_101 = arith.constant 0 : index
    %c0_102 = arith.constant 0 : index
    %81 = vector.load %arg4[%c1_99, %c3_100, %c0_101, %c0_102] : memref<2x4x128x32xbf16, #tpu.memory_space<vmem>>, vector<1x1x128x32xbf16>
    %82 = vector.shape_cast %81 : vector<1x1x128x32xbf16> to vector<128x32xbf16>
    %cst_103 = arith.constant dense<0.000000e+00> : vector<16x32xf32>
    %83 = tpu.matmul %47, %82, %cst_103 {dimension_numbers = #tpu.dot_dimension_numbers<[1], [0], [0], [1], [0, 0, 1, 1], [], []>} : vector<16x128xbf16>, vector<128x32xbf16>, vector<16x32xf32> -> vector<16x32xf32>
    %c1_104 = arith.constant 1 : index
    %c3_105 = arith.constant 3 : index
    %c0_106 = arith.constant 0 : index
    %c0_107 = arith.constant 0 : index
    %84 = vector.load %arg5[%c1_104, %c3_105, %c0_106, %c0_107] : memref<2x4x1x32xf32, #tpu.memory_space<vmem>>, vector<1x1x1x32xf32>
    %85 = vector.shape_cast %84 : vector<1x1x1x32xf32> to vector<1x32xf32>
    %86 = vector.broadcast %85 : vector<1x32xf32> to vector<16x32xf32>
    %87 = arith.addf %83, %86 : vector<16x32xf32>
    %88 = arith.truncf %87 : vector<16x32xf32> to vector<16x32xbf16>
    %c1_108 = arith.constant 1 : index
    %c0_109 = arith.constant 0 : index
    %c3_110 = arith.constant 3 : index
    %c0_111 = arith.constant 0 : index
    %c0_112 = arith.constant 0 : index
    %89 = vector.load %arg6[%c1_108, %c0_109, %c3_110, %c0_111, %c0_112] : memref<2x1x4x16x32xbf16, #tpu.memory_space<vmem>>, vector<1x1x1x16x32xbf16>
    %90 = vector.shape_cast %89 : vector<1x1x1x16x32xbf16> to vector<16x32xbf16>
    %91 = vector.shape_cast %88 : vector<16x32xbf16> to vector<1x1x1x16x32xbf16>
    tpu.vector_store %arg6[%c1_108, %c0_109, %c3_110, %c0_111, %c0_112], %91 {strides = array<i32>} : memref<2x1x4x16x32xbf16, #tpu.memory_space<vmem>>, vector<1x1x1x16x32xbf16>,
    return
  }
  func.func @transform_0(%arg0: i32, %arg1: i32) -> (i32, i32, i32) {
    %c0_i32 = arith.constant 0 : i32
    %c0_i32_0 = arith.constant 0 : i32
    return %arg0, %arg1, %c0_i32 : i32, i32, i32
  }
  func.func @transform_1(%arg0: i32, %arg1: i32) -> (i32, i32, i32) {
    %c0_i32 = arith.constant 0 : i32
    %c0_i32_0 = arith.constant 0 : i32
    return %arg0, %arg1, %c0_i32 : i32, i32, i32
  }
  func.func @transform_2(%arg0: i32, %arg1: i32) -> (i32, i32, i32, i32) {
    %c0_i32 = arith.constant 0 : i32
    %c0_i32_0 = arith.constant 0 : i32
    %c0_i32_1 = arith.constant 0 : i32
    %c0_i32_2 = arith.constant 0 : i32
    %c0_i32_3 = arith.constant 0 : i32
    return %c0_i32, %c0_i32_0, %c0_i32_1, %c0_i32_2 : i32, i32, i32, i32
  }
  func.func @transform_3(%arg0: i32, %arg1: i32) -> (i32, i32, i32, i32) {
    %c0_i32 = arith.constant 0 : i32
    %c0_i32_0 = arith.constant 0 : i32
    %c0_i32_1 = arith.constant 0 : i32
    %c0_i32_2 = arith.constant 0 : i32
    %c0_i32_3 = arith.constant 0 : i32
    return %c0_i32, %c0_i32_0, %c0_i32_1, %c0_i32_2 : i32, i32, i32, i32
  }
  func.func @transform_4(%arg0: i32, %arg1: i32) -> (i32, i32, i32, i32, i32) {
    %c0_i32 = arith.constant 0 : i32
    %c0_i32_0 = arith.constant 0 : i32
    %c0_i32_1 = arith.constant 0 : i32
    %c0_i32_2 = arith.constant 0 : i32
    return %c0_i32, %arg0, %c0_i32_0, %arg1, %c0_i32_1 : i32, i32, i32, i32, i32
  }
}

</mosaic_0001>

<llo_original>
// kernel: tpu_custom_call.1
$region0: #{tpu_custom_call.1}
  #allocation0 [shape = 'u32[]', space=smem, size = 0x4, offset = 0x4, fixed_abs, tag = 'smem constant byte address 0x4 - core index']
  #allocation1 [shape = 'u32[144,128]{1,0:T(1,128)}', space=vmem, size = 0x12000, scoped, tag = 'internal scratch']
  #allocation4 [shape = 's32[]', space=sflag, size = 0x4, offset = 0, fixed_abs, tag = 'sflag constant byte address 0x0 - dummy sync flag']
  %s0 = inlined_call_operand.vmem [shape: bf16[2,16,128], index: 0, kind: input, shape index: {}]
  %s1 = inlined_call_operand.vmem [shape: bf16[2,16,128], index: 1, kind: input, shape index: {}]
  %s2 = inlined_call_operand.vmem [shape: bf16[2,4,128,32], index: 2, kind: input, shape index: {}]
  %s3 = inlined_call_operand.vmem [shape: f32[2,4,1,32], index: 3, kind: input, shape index: {}]
  %s4 = inlined_call_operand.hbm [shape: bf16[2,2,4,16,32], index: 4, kind: output, shape index: {}]
  %s5 = sld [smem:[#allocation0]]
  $region49: #{tpu_custom_call.1} parent=0
    _
  %s7 = ssub.s32 1, %s5
  %s8 = scalar_select 0, %s7, %s5
  $region1: #{tpu_custom_call.1} parent=0
    #allocation2 [shape = 'u8[65536]{0}', space=vmem, size = 0x10000, scoped, tag = 'output window, operand 0']
    #allocation3 [shape = 's32[2]{0}', space=sflag, size = 0x8, scoped, tag = 'scoped memory for tpu_custom_call.1']
    %9 = vsyncpa [#allocation3], 0
    %s10 = scalar_lea.sflag [#allocation3], 1
    %11 = vsyncpa %s10, 0
    loop: start=0, step=1, limit=4
    $region2: #{tpu_custom_call.1} parent=1 // loop_pre_header
      _
    $region3: #{tpu_custom_call.1} parent=1 // loop_header
      %s13 = sphi 0, %s17
      %p14 = scmp.ge.s32.totalorder %s13, 4
      %s20 = sphi 0, %s32
      %s21 = sphi 0, %s28
      %s22 = sphi 0, %s20
      %s23 = sphi 0, %s21
      %s24 = sphi 0, %s22
      %s25 = sphi 0, %s23
      %s37 = sphi 0, %s39
      %s40 = sphi 0, %s37
      %s41 = sphi 0, %s40
      %s57 = sphi 0, %s41
      %s65 = sphi 0, %s67
      %s68 = sphi 0, %s65
      %s69 = sphi 0, %s68
      %s85 = sphi 0, %s69
      %s89 = sphi 0, %s89
      %s91 = sphi 0, %s89
      %s92 = sphi 0, %s91
      %s106 = sphi 0, %s92
      %s110 = sphi 0, %s110
      %s112 = sphi 0, %s110
      %s113 = sphi 0, %s112
      %s127 = sphi 0, %s113
      %s135 = sphi 0, %s137
      %s138 = sphi 0, %s135
      %s139 = sphi 0, %s138
      %s155 = sphi 0, %s139
    $region4: #{tpu_custom_call.1} parent=1 // loop_header_branch
      %16 = sbr.rel (%p14) target = $region8
    $region5: #{tpu_custom_call.1} parent=1 // loop_body
      %s18 = ssub.s32 %s13, 1
      %s19 = ssub.s32 %s13, 2
      %s26 = sadd.s32 1, %s21
      %p27 = scmp.ge.s32.totalorder %s26, 1
      %s28 = scalar_select %p27, 0, %s26
      %s29 = sadd.s32 1, %s20
      %s30 = scalar_select %p27, %s29, %s20
      %p31 = scmp.ge.s32.totalorder %s30, 2
      %s32 = scalar_select %p31, 0, %s30
      %s33 = ssub.s32 %s20, %s32
      %s34 = ssub.s32 %s21, %s28
      %s35 = sor.u32 %s33, %s34
      %p36 = scmp.eq.s32.totalorder %s35, 0
      %s38 = sadd.s32 %s37, 1
      %s39 = scalar_select %p36, %s37, %s38
      %p42 = pneg %p36
      %p43 = scmp.eq.s32.totalorder %s13, 1
      %p44 = por %p42, %p43
      %p45 = scmp.ne.s32.totalorder %s37, %s40
      %p46 = scmp.eq.s32.totalorder %s13, 0
      %p47 = por %p45, %p46
      %p48 = scmp.ne.s32.totalorder %s37, %s40
      %p49 = scmp.eq.s32.totalorder %s18, 1
      %p50 = por %p48, %p49
      %p51 = scmp.ne.s32.totalorder %s40, %s41
      %p52 = scmp.eq.s32.totalorder %s18, 0
      %p53 = por %p51, %p52
      %p54 = scmp.ne.s32.totalorder %s40, %s41
      %p55 = scmp.eq.s32.totalorder %s19, 1
      %p56 = por %p54, %p55
      %p58 = scmp.ne.s32.totalorder %s41, %s57
      %p59 = scmp.eq.s32.totalorder %s19, 0
      %p60 = por %p58, %p59
      %s61 = ssub.s32 %s20, %s32
      %s62 = ssub.s32 %s21, %s28
      %s63 = sor.u32 %s61, %s62
      %p64 = scmp.eq.s32.totalorder %s63, 0
      %s66 = sadd.s32 %s65, 1
      %s67 = scalar_select %p64, %s65, %s66
      %p70 = pneg %p64
      %p71 = scmp.eq.s32.totalorder %s13, 1
      %p72 = por %p70, %p71
      %p73 = scmp.ne.s32.totalorder %s65, %s68
      %p74 = scmp.eq.s32.totalorder %s13, 0
      %p75 = por %p73, %p74
      %p76 = scmp.ne.s32.totalorder %s65, %s68
      %p77 = scmp.eq.s32.totalorder %s18, 1
      %p78 = por %p76, %p77
      %p79 = scmp.ne.s32.totalorder %s68, %s69
      %p80 = scmp.eq.s32.totalorder %s18, 0
      %p81 = por %p79, %p80
      %p82 = scmp.ne.s32.totalorder %s68, %s69
      %p83 = scmp.eq.s32.totalorder %s19, 1
      %p84 = por %p82, %p83
      %p86 = scmp.ne.s32.totalorder %s69, %s85
      %p87 = scmp.eq.s32.totalorder %s19, 0
      %p88 = por %p86, %p87
      %s90 = sadd.s32 %s89, 1
      %p93 = scmp.eq.s32.totalorder %s13, 1
      %p94 = scmp.ne.s32.totalorder %s89, %s91
      %p95 = scmp.eq.s32.totalorder %s13, 0
      %p96 = por %p94, %p95
      %p97 = scmp.ne.s32.totalorder %s89, %s91
      %p98 = scmp.eq.s32.totalorder %s18, 1
      %p99 = por %p97, %p98
      %p100 = scmp.ne.s32.totalorder %s91, %s92
      %p101 = scmp.eq.s32.totalorder %s18, 0
      %p102 = por %p100, %p101
      %p103 = scmp.ne.s32.totalorder %s91, %s92
      %p104 = scmp.eq.s32.totalorder %s19, 1
      %p105 = por %p103, %p104
      %p107 = scmp.ne.s32.totalorder %s92, %s106
      %p108 = scmp.eq.s32.totalorder %s19, 0
      %p109 = por %p107, %p108
      %s111 = sadd.s32 %s110, 1
      %p114 = scmp.eq.s32.totalorder %s13, 1
      %p115 = scmp.ne.s32.totalorder %s110, %s112
      %p116 = scmp.eq.s32.totalorder %s13, 0
      %p117 = por %p115, %p116
      %p118 = scmp.ne.s32.totalorder %s110, %s112
      %p119 = scmp.eq.s32.totalorder %s18, 1
      %p120 = por %p118, %p119
      %p121 = scmp.ne.s32.totalorder %s112, %s113
      %p122 = scmp.eq.s32.totalorder %s18, 0
      %p123 = por %p121, %p122
      %p124 = scmp.ne.s32.totalorder %s112, %s113
      %p125 = scmp.eq.s32.totalorder %s19, 1
      %p126 = por %p124, %p125
      %p128 = scmp.ne.s32.totalorder %s113, %s127
      %p129 = scmp.eq.s32.totalorder %s19, 0
      %p130 = por %p128, %p129
      %s131 = ssub.s32 %s20, %s32
      %s132 = ssub.s32 %s21, %s28
      %s133 = sor.u32 %s131, %s132
      %p134 = scmp.eq.s32.totalorder %s133, 0
      %s136 = sadd.s32 %s135, 1
      %s137 = scalar_select %p134, %s135, %s136
      %p140 = pneg %p134
      %p141 = scmp.eq.s32.totalorder %s13, 1
      %p142 = por %p140, %p141
      %p143 = scmp.ne.s32.totalorder %s135, %s138
      %p144 = scmp.eq.s32.totalorder %s13, 0
      %p145 = por %p143, %p144
      %p146 = scmp.ne.s32.totalorder %s135, %s138
      %p147 = scmp.eq.s32.totalorder %s18, 1
      %p148 = por %p146, %p147
      %p149 = scmp.ne.s32.totalorder %s138, %s139
      %p150 = scmp.eq.s32.totalorder %s18, 0
      %p151 = por %p149, %p150
      %p152 = scmp.ne.s32.totalorder %s138, %s139
      %p153 = scmp.eq.s32.totalorder %s19, 1
      %p154 = por %p152, %p153
      %p156 = scmp.ne.s32.totalorder %s139, %s155
      %p157 = scmp.eq.s32.totalorder %s19, 0
      %p158 = por %p156, %p157
      %p159 = scmp.le.s32.totalorder 1, %s13
      %p160 = scmp.lt.s32.totalorder %s13, 3
      %p161 = pnand %p159, %p160
      %p162 = pneg %p161
      // Predicated region
      $region9: #{tpu_custom_call.1} parent=5 // pred_check
        _
      $region10: #{tpu_custom_call.1} parent=5 // pred_check_branch
        %164 = sbr.rel (%p161) target = $region12
      $region11: #{tpu_custom_call.1} parent=5 // pred_region
        %s165 = ssub.s32 %s13, 1
        // Predicated region
        $region13: #{tpu_custom_call.1} parent=11 // pred_check
          %p166 = pneg %p102
        $region14: #{tpu_custom_call.1} parent=11 // pred_check_branch
          %168 = sbr.rel (%p166) target = $region16
        $region15: #{tpu_custom_call.1} parent=11 // pred_region
          _
        $region16: #{tpu_custom_call.1} parent=11 // pred_fallthru
          _
        // Predicated region
        $region17: #{tpu_custom_call.1} parent=11 // pred_check
          %p169 = pneg %p123
        $region18: #{tpu_custom_call.1} parent=11 // pred_check_branch
          %171 = sbr.rel (%p169) target = $region20
        $region19: #{tpu_custom_call.1} parent=11 // pred_region
          _
        $region20: #{tpu_custom_call.1} parent=11 // pred_fallthru
          _
      $region12: #{tpu_custom_call.1} parent=5 // pred_fallthru
        _
      %p172 = scmp.lt.s32.totalorder %s13, 2
      // Predicated region
      $region21: #{tpu_custom_call.1} parent=5 // pred_check
        %p173 = pneg %p172
      $region22: #{tpu_custom_call.1} parent=5 // pred_check_branch
        %175 = sbr.rel (%p173) target = $region24
      $region23: #{tpu_custom_call.1} parent=5 // pred_region
        // Predicated region
        $region25: #{tpu_custom_call.1} parent=23 // pred_check
          %p176 = pneg %p47
        $region26: #{tpu_custom_call.1} parent=23 // pred_check_branch
          %178 = sbr.rel (%p176) target = $region28
        $region27: #{tpu_custom_call.1} parent=23 // pred_region
          %s179 = smul.u32 2, %s21
          %p180 = scmp.lt.s32.totalorder %s20, 1
          %s181 = scalar_select %p180, %s20, 1
          %p182 = scmp.lt.s32.totalorder %s179, 1
          %s183 = scalar_select %p182, %s179, 1
          %s184 = smul.addr %s181, 2
          %s185 = sadd.s32 %s183, %s184
          %s186 = smul.addr %s185, 4
          %s187 = scalar_lea.vmem %s0, %s186
          %s188 = smul.u32 2, %s21
        $region28: #{tpu_custom_call.1} parent=23 // pred_fallthru
          _
        // Predicated region
        $region29: #{tpu_custom_call.1} parent=23 // pred_check
          %p189 = pneg %p75
        $region30: #{tpu_custom_call.1} parent=23 // pred_check_branch
          %191 = sbr.rel (%p189) target = $region32
        $region31: #{tpu_custom_call.1} parent=23 // pred_region
          %s192 = smul.u32 2, %s21
          %p193 = scmp.lt.s32.totalorder %s20, 1
          %s194 = scalar_select %p193, %s20, 1
          %p195 = scmp.lt.s32.totalorder %s192, 1
          %s196 = scalar_select %p195, %s192, 1
          %s197 = smul.addr %s194, 2
          %s198 = sadd.s32 %s196, %s197
          %s199 = smul.addr %s198, 4
          %s200 = scalar_lea.vmem %s1, %s199
          %s201 = smul.u32 2, %s21
        $region32: #{tpu_custom_call.1} parent=23 // pred_fallthru
          _
      $region24: #{tpu_custom_call.1} parent=5 // pred_fallthru
        _
      %p202 = scmp.le.s32.totalorder 1, %s13
      %p203 = scmp.lt.s32.totalorder %s13, 3
      %p204 = pnand %p202, %p203
      %p205 = pneg %p204
      // Predicated region
      $region33: #{tpu_custom_call.1} parent=5 // pred_check
        _
      $region34: #{tpu_custom_call.1} parent=5 // pred_check_branch
        %207 = sbr.rel (%p204) target = $region36
      $region35: #{tpu_custom_call.1} parent=5 // pred_region
        %s208 = ssub.s32 %s13, 1
        %s209 = smul.u32 2, %s23
        %p210 = scmp.lt.s32.totalorder %s22, 1
        %s211 = scalar_select %p210, %s22, 1
        %p212 = scmp.lt.s32.totalorder %s209, 1
        %s213 = scalar_select %p212, %s209, 1
        %s214 = smul.addr %s211, 2
        %s215 = sadd.s32 %s213, %s214
        %s216 = smul.addr %s215, 4
        %s217 = scalar_lea.vmem %s0, %s216
        %p218 = pneg %p53
        %p219 = pneg %p50
        %s220 = smul.u32 2, %s23
        %p221 = scmp.lt.s32.totalorder %s22, 1
        %s222 = scalar_select %p221, %s22, 1
        %p223 = scmp.lt.s32.totalorder %s220, 1
        %s224 = scalar_select %p223, %s220, 1
        %s225 = smul.addr %s222, 2
        %s226 = sadd.s32 %s224, %s225
        %s227 = smul.addr %s226, 4
        %s228 = scalar_lea.vmem %s1, %s227
        %p229 = pneg %p81
        %p230 = pneg %p78
        %p231 = pneg %p102
        %p232 = pneg %p99
        %p233 = pneg %p123
        %p234 = pneg %p120
        %p235 = pneg %p151
        %p236 = pneg %p148
        %s237 = sand.u32 %s138, 1
        %s238 = scalar_lea.sflag [#allocation3], %s237
        %s239 = sand.u32 %s138, 1
        %s240 = smul.addr %s239, 64
        %s241 = scalar_lea.vmem [#allocation2], %s240
        %s242 = smul.u32 2, %s23
        %p243 = scmp.lt.s32.totalorder %s22, 1
        %s244 = scalar_select %p243, %s22, 1
        %p245 = scmp.lt.s32.totalorder %s242, 1
        %s246 = scalar_select %p245, %s242, 1
        %s247 = smul.addr %s244, 2
        %s248 = sadd.s32 %s246, %s247
        %s249 = smul.addr %s248, 4
        %s250 = scalar_lea.vmem %s0, %s249
        %s251 = smul.u32 2, %s23
        %s252 = smul.u32 2, %s23
        %p253 = scmp.lt.s32.totalorder %s22, 1
        %s254 = scalar_select %p253, %s22, 1
        %p255 = scmp.lt.s32.totalorder %s252, 1
        %s256 = scalar_select %p255, %s252, 1
        %s257 = smul.addr %s254, 2
        %s258 = sadd.s32 %s256, %s257
        %s259 = smul.addr %s258, 4
        %s260 = scalar_lea.vmem %s1, %s259
        %s261 = smul.u32 2, %s23
        %s262 = smul.u32 2, %s23
        %v264 = vld [vmem:[%s250] sm:$0xf]
        %v265 = vld [vmem:[%s250 + $0x4] sm:$0xf]
        %v266 = vld [vmem:[%s2] sm:$0xf]
        %v267 = vld [vmem:[%s2 + $0x4] sm:$0xf]
        %v268 = vld [vmem:[%s2 + $0x8] sm:$0xf]
        %v269 = vld [vmem:[%s2 + $0xc] sm:$0xf]
        %v270 = vld [vmem:[%s2 + $0x10] sm:$0xf]
        %v271 = vld [vmem:[%s2 + $0x14] sm:$0xf]
        %v272 = vld [vmem:[%s2 + $0x18] sm:$0xf]
        %v273 = vld [vmem:[%s2 + $0x1c] sm:$0xf]
        %v274 = vld [vmem:[%s2 + $0x20] sm:$0xf]
        %v275 = vld [vmem:[%s2 + $0x24] sm:$0xf]
        %v276 = vld [vmem:[%s2 + $0x28] sm:$0xf]
        %v277 = vld [vmem:[%s2 + $0x2c] sm:$0xf]
        %v278 = vld [vmem:[%s2 + $0x30] sm:$0xf]
        %v279 = vld [vmem:[%s2 + $0x34] sm:$0xf]
        %v280 = vld [vmem:[%s2 + $0x38] sm:$0xf]
        %v281 = vld [vmem:[%s2 + $0x3c] sm:$0xf]
        %v282 = vld [vmem:[%s3] sm:$0x1]
        %v284 = vlaneseq
        %v285 = vshrl.u32 %v284, 7
        %v286 = vsub.s32 0, %v285
        %v287 = vrot.slane %v282, %v286
        %v291 = vunpack.c.l.b16 %v264
        %v292 = vunpack.c.l.b16 %v265
        %v293 = vpack.c.b16 %v292, %v291
        %v311 = vunpack.c.l.b16 %v266
        %v312 = vunpack.c.l.b16 %v267
        %v313 = vunpack.c.l.b16 %v268
        %v314 = vunpack.c.l.b16 %v269
        %v315 = vunpack.c.l.b16 %v270
        %v316 = vunpack.c.l.b16 %v271
        %v317 = vunpack.c.l.b16 %v272
        %v318 = vunpack.c.l.b16 %v273
        %v319 = vunpack.c.l.b16 %v274
        %v320 = vunpack.c.l.b16 %v275
        %v321 = vunpack.c.l.b16 %v276
        %v322 = vunpack.c.l.b16 %v277
        %v323 = vunpack.c.l.b16 %v278
        %v324 = vunpack.c.l.b16 %v279
        %v325 = vunpack.c.l.b16 %v280
        %v326 = vunpack.c.l.b16 %v281
        %v327 = vpack.c.b16 %v312, %v311
        %v328 = vpack.c.b16 %v314, %v313
        %v329 = vpack.c.b16 %v316, %v315
        %v330 = vpack.c.b16 %v318, %v317
        %v331 = vpack.c.b16 %v320, %v319
        %v332 = vpack.c.b16 %v322, %v321
        %v333 = vpack.c.b16 %v324, %v323
        %v334 = vpack.c.b16 %v326, %v325
        %343 = vmatprep.subr.bf16.mxu0 0
        %344 = vmatpush1.bf16.msra.mxu0 %v334
        %345 = vmatprep.subr.bf16.mxu0 0
        %346 = vmatpush1.bf16.msra.mxu0 %v333
        %347 = vmatprep.subr.bf16.mxu0 0
        %348 = vmatpush1.bf16.msra.mxu0 %v332
        %349 = vmatprep.subr.bf16.mxu0 0
        %350 = vmatpush1.bf16.msra.mxu0 %v331
        %351 = vmatprep.subr.bf16.mxu0 0
        %352 = vmatpush1.bf16.msra.mxu0 %v330
        %353 = vmatprep.subr.bf16.mxu0 0
        %354 = vmatpush1.bf16.msra.mxu0 %v329
        %355 = vmatprep.subr.bf16.mxu0 0
        %356 = vmatpush1.bf16.msra.mxu0 %v328
        %357 = vmatprep.subr.bf16.mxu0 0
        %358 = vmatpush1.bf16.msra.mxu0 %v327
        %359 = vmatprep.subr.bf16.mxu0 0
        %360 = vmatpush2.bf16.msra.mxu0 0
        %361 = vmatprep.subr.bf16.mxu0 0
        %362 = vmatpush2.bf16.msra.mxu0 0
        %363 = vmatprep.subr.bf16.mxu0 0
        %364 = vmatpush2.bf16.msra.mxu0 0
        %365 = vmatprep.subr.bf16.mxu0 0
        %366 = vmatpush2.bf16.msra.mxu0 0
        %367 = vmatprep.subr.bf16.mxu0 0
        %368 = vmatpush2.bf16.msra.mxu0 0
        %369 = vmatprep.subr.bf16.mxu0 0
        %370 = vmatpush2.bf16.msra.mxu0 0
        %371 = vmatprep.subr.bf16.mxu0 0
        %372 = vmatpush2.bf16.msra.mxu0 0
        %373 = vmatprep.subr.bf16.mxu0 0
        %374 = vmatpush2.bf16.msra.mxu0 0
        %375 = vmatprep.mubr.bf16.mxu0 0
        %376 = vmatmul.mubr.bf16.gmra.mxu0 %v293
        %v377 = vpop.f32.mrf.mxu0
        %v378 = vadd.f32 %v287, %v377
        %v379 = vpop.f32.mrf.mxu0
        %v380 = vpop.f32.mrf.mxu0
        %v381 = vadd.f32 %v287, %v380
        %v382 = vpop.f32.mrf.mxu0
        %383 = vdwg.mxu0
        %v384 = vpack.c.bf16 %v381, %v378
        %v386 = vunpack.c.l.b16 %v384
        %v387 = vunpack.c.h.b16 %v384
        %v388 = vpack.c.b16 %v386, %v386
        %v389 = vpack.c.b16 %v387, %v387
        %vm392 = vcmask 257024
        %393 = vst.msk [vmem:[%s241] sm:$0xf] %vm392, %v388
        %394 = vst.msk [vmem:[%s241 + $0x4] sm:$0xf] %vm392, %v389
        %s395 = scalar_lea.vmem %s2, 64
        %v396 = vld [vmem:[%s395] sm:$0xf]
        %v397 = vld [vmem:[%s395 + $0x4] sm:$0xf]
        %v398 = vld [vmem:[%s395 + $0x8] sm:$0xf]
        %v399 = vld [vmem:[%s395 + $0xc] sm:$0xf]
        %v400 = vld [vmem:[%s395 + $0x10] sm:$0xf]
        %v401 = vld [vmem:[%s395 + $0x14] sm:$0xf]
        %v402 = vld [vmem:[%s395 + $0x18] sm:$0xf]
        %v403 = vld [vmem:[%s395 + $0x1c] sm:$0xf]
        %v404 = vld [vmem:[%s395 + $0x20] sm:$0xf]
        %v405 = vld [vmem:[%s395 + $0x24] sm:$0xf]
        %v406 = vld [vmem:[%s395 + $0x28] sm:$0xf]
        %v407 = vld [vmem:[%s395 + $0x2c] sm:$0xf]
        %v408 = vld [vmem:[%s395 + $0x30] sm:$0xf]
        %v409 = vld [vmem:[%s395 + $0x34] sm:$0xf]
        %v410 = vld [vmem:[%s395 + $0x38] sm:$0xf]
        %v411 = vld [vmem:[%s395 + $0x3c] sm:$0xf]
        %s412 = scalar_lea.vmem %s3, 1
        %v413 = vld [vmem:[%s412] sm:$0x1]
        %v415 = vlaneseq
        %v416 = vshrl.u32 %v415, 7
        %v417 = vsub.s32 0, %v416
        %v418 = vrot.slane %v413, %v417
        %v436 = vunpack.c.l.b16 %v396
        %v437 = vunpack.c.l.b16 %v397
        %v438 = vunpack.c.l.b16 %v398
        %v439 = vunpack.c.l.b16 %v399
        %v440 = vunpack.c.l.b16 %v400
        %v441 = vunpack.c.l.b16 %v401
        %v442 = vunpack.c.l.b16 %v402
        %v443 = vunpack.c.l.b16 %v403
        %v444 = vunpack.c.l.b16 %v404
        %v445 = vunpack.c.l.b16 %v405
        %v446 = vunpack.c.l.b16 %v406
        %v447 = vunpack.c.l.b16 %v407
        %v448 = vunpack.c.l.b16 %v408
        %v449 = vunpack.c.l.b16 %v409
        %v450 = vunpack.c.l.b16 %v410
        %v451 = vunpack.c.l.b16 %v411
        %v452 = vpack.c.b16 %v437, %v436
        %v453 = vpack.c.b16 %v439, %v438
        %v454 = vpack.c.b16 %v441, %v440
        %v455 = vpack.c.b16 %v443, %v442
        %v456 = vpack.c.b16 %v445, %v444
        %v457 = vpack.c.b16 %v447, %v446
        %v458 = vpack.c.b16 %v449, %v448
        %v459 = vpack.c.b16 %v451, %v450
        %468 = vmatprep.subr.bf16.mxu0 0
        %469 = vmatpush1.bf16.msra.mxu0 %v459
        %470 = vmatprep.subr.bf16.mxu0 0
        %471 = vmatpush1.bf16.msra.mxu0 %v458
        %472 = vmatprep.subr.bf16.mxu0 0
        %473 = vmatpush1.bf16.msra.mxu0 %v457
        %474 = vmatprep.subr.bf16.mxu0 0
        %475 = vmatpush1.bf16.msra.mxu0 %v456
        %476 = vmatprep.subr.bf16.mxu0 0
        %477 = vmatpush1.bf16.msra.mxu0 %v455
        %478 = vmatprep.subr.bf16.mxu0 0
        %479 = vmatpush1.bf16.msra.mxu0 %v454
        %480 = vmatprep.subr.bf16.mxu0 0
        %481 = vmatpush1.bf16.msra.mxu0 %v453
        %482 = vmatprep.subr.bf16.mxu0 0
        %483 = vmatpush1.bf16.msra.mxu0 %v452
        %484 = vmatprep.subr.bf16.mxu0 0
        %485 = vmatpush2.bf16.msra.mxu0 0
        %486 = vmatprep.subr.bf16.mxu0 0
        %487 = vmatpush2.bf16.msra.mxu0 0
        %488 = vmatprep.subr.bf16.mxu0 0
        %489 = vmatpush2.bf16.msra.mxu0 0
        %490 = vmatprep.subr.bf16.mxu0 0
        %491 = vmatpush2.bf16.msra.mxu0 0
        %492 = vmatprep.subr.bf16.mxu0 0
        %493 = vmatpush2.bf16.msra.mxu0 0
        %494 = vmatprep.subr.bf16.mxu0 0
        %495 = vmatpush2.bf16.msra.mxu0 0
        %496 = vmatprep.subr.bf16.mxu0 0
        %497 = vmatpush2.bf16.msra.mxu0 0
        %498 = vmatprep.subr.bf16.mxu0 0
        %499 = vmatpush2.bf16.msra.mxu0 0
        %500 = vmatprep.mubr.bf16.mxu0 0
        %501 = vmatmul.mubr.bf16.gmra.mxu0 %v293
        %v502 = vpop.f32.mrf.mxu0
        %v503 = vadd.f32 %v418, %v502
        %v504 = vpop.f32.mrf.mxu0
        %v505 = vpop.f32.mrf.mxu0
        %v506 = vadd.f32 %v418, %v505
        %v507 = vpop.f32.mrf.mxu0
        %508 = vdwg.mxu0
        %v509 = vpack.c.bf16 %v506, %v503
        %v511 = vunpack.c.l.b16 %v509
        %v512 = vunpack.c.h.b16 %v509
        %v513 = vpack.c.b16 %v511, %v511
        %v514 = vpack.c.b16 %v512, %v512
        %s517 = scalar_lea.vmem %s241, 8 [#allocation2]
        %518 = vst.msk [vmem:[%s517] sm:$0xf] %vm392, %v513
        %519 = vst.msk [vmem:[%s517 + $0x4] sm:$0xf] %vm392, %v514
        %s520 = scalar_lea.vmem %s2, 128
        %v521 = vld [vmem:[%s520] sm:$0xf]
        %v522 = vld [vmem:[%s520 + $0x4] sm:$0xf]
        %v523 = vld [vmem:[%s520 + $0x8] sm:$0xf]
        %v524 = vld [vmem:[%s520 + $0xc] sm:$0xf]
        %v525 = vld [vmem:[%s520 + $0x10] sm:$0xf]
        %v526 = vld [vmem:[%s520 + $0x14] sm:$0xf]
        %v527 = vld [vmem:[%s520 + $0x18] sm:$0xf]
        %v528 = vld [vmem:[%s520 + $0x1c] sm:$0xf]
        %v529 = vld [vmem:[%s520 + $0x20] sm:$0xf]
        %v530 = vld [vmem:[%s520 + $0x24] sm:$0xf]
        %v531 = vld [vmem:[%s520 + $0x28] sm:$0xf]
        %v532 = vld [vmem:[%s520 + $0x2c] sm:$0xf]
        %v533 = vld [vmem:[%s520 + $0x30] sm:$0xf]
        %v534 = vld [vmem:[%s520 + $0x34] sm:$0xf]
        %v535 = vld [vmem:[%s520 + $0x38] sm:$0xf]
        %v536 = vld [vmem:[%s520 + $0x3c] sm:$0xf]
        %s537 = scalar_lea.vmem %s3, 2
        %v538 = vld [vmem:[%s537] sm:$0x1]
        %v540 = vlaneseq
        %v541 = vshrl.u32 %v540, 7
        %v542 = vsub.s32 0, %v541
        %v543 = vrot.slane %v538, %v542
        %v561 = vunpack.c.l.b16 %v521
        %v562 = vunpack.c.l.b16 %v522
        %v563 = vunpack.c.l.b16 %v523
        %v564 = vunpack.c.l.b16 %v524
        %v565 = vunpack.c.l.b16 %v525
        %v566 = vunpack.c.l.b16 %v526
        %v567 = vunpack.c.l.b16 %v527
        %v568 = vunpack.c.l.b16 %v528
        %v569 = vunpack.c.l.b16 %v529
        %v570 = vunpack.c.l.b16 %v530
        %v571 = vunpack.c.l.b16 %v531
        %v572 = vunpack.c.l.b16 %v532
        %v573 = vunpack.c.l.b16 %v533
        %v574 = vunpack.c.l.b16 %v534
        %v575 = vunpack.c.l.b16 %v535
        %v576 = vunpack.c.l.b16 %v536
        %v577 = vpack.c.b16 %v562, %v561
        %v578 = vpack.c.b16 %v564, %v563
        %v579 = vpack.c.b16 %v566, %v565
        %v580 = vpack.c.b16 %v568, %v567
        %v581 = vpack.c.b16 %v570, %v569
        %v582 = vpack.c.b16 %v572, %v571
        %v583 = vpack.c.b16 %v574, %v573
        %v584 = vpack.c.b16 %v576, %v575
        %593 = vmatprep.subr.bf16.mxu0 0
        %594 = vmatpush1.bf16.msra.mxu0 %v584
        %595 = vmatprep.subr.bf16.mxu0 0
        %596 = vmatpush1.bf16.msra.mxu0 %v583
        %597 = vmatprep.subr.bf16.mxu0 0
        %598 = vmatpush1.bf16.msra.mxu0 %v582
        %599 = vmatprep.subr.bf16.mxu0 0
        %600 = vmatpush1.bf16.msra.mxu0 %v581
        %601 = vmatprep.subr.bf16.mxu0 0
        %602 = vmatpush1.bf16.msra.mxu0 %v580
        %603 = vmatprep.subr.bf16.mxu0 0
        %604 = vmatpush1.bf16.msra.mxu0 %v579
        %605 = vmatprep.subr.bf16.mxu0 0
        %606 = vmatpush1.bf16.msra.mxu0 %v578
        %607 = vmatprep.subr.bf16.mxu0 0
        %608 = vmatpush1.bf16.msra.mxu0 %v577
        %609 = vmatprep.subr.bf16.mxu0 0
        %610 = vmatpush2.bf16.msra.mxu0 0
        %611 = vmatprep.subr.bf16.mxu0 0
        %612 = vmatpush2.bf16.msra.mxu0 0
        %613 = vmatprep.subr.bf16.mxu0 0
        %614 = vmatpush2.bf16.msra.mxu0 0
        %615 = vmatprep.subr.bf16.mxu0 0
        %616 = vmatpush2.bf16.msra.mxu0 0
        %617 = vmatprep.subr.bf16.mxu0 0
        %618 = vmatpush2.bf16.msra.mxu0 0
        %619 = vmatprep.subr.bf16.mxu0 0
        %620 = vmatpush2.bf16.msra.mxu0 0
        %621 = vmatprep.subr.bf16.mxu0 0
        %622 = vmatpush2.bf16.msra.mxu0 0
        %623 = vmatprep.subr.bf16.mxu0 0
        %624 = vmatpush2.bf16.msra.mxu0 0
        %625 = vmatprep.mubr.bf16.mxu0 0
        %626 = vmatmul.mubr.bf16.gmra.mxu0 %v293
        %v627 = vpop.f32.mrf.mxu0
        %v628 = vadd.f32 %v543, %v627
        %v629 = vpop.f32.mrf.mxu0
        %v630 = vpop.f32.mrf.mxu0
        %v631 = vadd.f32 %v543, %v630
        %v632 = vpop.f32.mrf.mxu0
        %633 = vdwg.mxu0
        %v634 = vpack.c.bf16 %v631, %v628
        %v636 = vunpack.c.l.b16 %v634
        %v637 = vunpack.c.h.b16 %v634
        %v638 = vpack.c.b16 %v636, %v636
        %v639 = vpack.c.b16 %v637, %v637
        %s642 = scalar_lea.vmem %s241, 16 [#allocation2]
        %643 = vst.msk [vmem:[%s642] sm:$0xf] %vm392, %v638
        %644 = vst.msk [vmem:[%s642 + $0x4] sm:$0xf] %vm392, %v639
        %s645 = scalar_lea.vmem %s2, 192
        %v646 = vld [vmem:[%s645] sm:$0xf]
        %v647 = vld [vmem:[%s645 + $0x4] sm:$0xf]
        %v648 = vld [vmem:[%s645 + $0x8] sm:$0xf]
        %v649 = vld [vmem:[%s645 + $0xc] sm:$0xf]
        %v650 = vld [vmem:[%s645 + $0x10] sm:$0xf]
        %v651 = vld [vmem:[%s645 + $0x14] sm:$0xf]
        %v652 = vld [vmem:[%s645 + $0x18] sm:$0xf]
        %v653 = vld [vmem:[%s645 + $0x1c] sm:$0xf]
        %v654 = vld [vmem:[%s645 + $0x20] sm:$0xf]
        %v655 = vld [vmem:[%s645 + $0x24] sm:$0xf]
        %v656 = vld [vmem:[%s645 + $0x28] sm:$0xf]
        %v657 = vld [vmem:[%s645 + $0x2c] sm:$0xf]
        %v658 = vld [vmem:[%s645 + $0x30] sm:$0xf]
        %v659 = vld [vmem:[%s645 + $0x34] sm:$0xf]
        %v660 = vld [vmem:[%s645 + $0x38] sm:$0xf]
        %v661 = vld [vmem:[%s645 + $0x3c] sm:$0xf]
        %s662 = scalar_lea.vmem %s3, 3
        %v663 = vld [vmem:[%s662] sm:$0x1]
        %v665 = vlaneseq
        %v666 = vshrl.u32 %v665, 7
        %v667 = vsub.s32 0, %v666
        %v668 = vrot.slane %v663, %v667
        %v686 = vunpack.c.l.b16 %v646
        %v687 = vunpack.c.l.b16 %v647
        %v688 = vunpack.c.l.b16 %v648
        %v689 = vunpack.c.l.b16 %v649
        %v690 = vunpack.c.l.b16 %v650
        %v691 = vunpack.c.l.b16 %v651
        %v692 = vunpack.c.l.b16 %v652
        %v693 = vunpack.c.l.b16 %v653
        %v694 = vunpack.c.l.b16 %v654
        %v695 = vunpack.c.l.b16 %v655
        %v696 = vunpack.c.l.b16 %v656
        %v697 = vunpack.c.l.b16 %v657
        %v698 = vunpack.c.l.b16 %v658
        %v699 = vunpack.c.l.b16 %v659
        %v700 = vunpack.c.l.b16 %v660
        %v701 = vunpack.c.l.b16 %v661
        %v702 = vpack.c.b16 %v687, %v686
        %v703 = vpack.c.b16 %v689, %v688
        %v704 = vpack.c.b16 %v691, %v690
        %v705 = vpack.c.b16 %v693, %v692
        %v706 = vpack.c.b16 %v695, %v694
        %v707 = vpack.c.b16 %v697, %v696
        %v708 = vpack.c.b16 %v699, %v698
        %v709 = vpack.c.b16 %v701, %v700
        %718 = vmatprep.subr.bf16.mxu0 0
        %719 = vmatpush1.bf16.msra.mxu0 %v709
        %720 = vmatprep.subr.bf16.mxu0 0
        %721 = vmatpush1.bf16.msra.mxu0 %v708
        %722 = vmatprep.subr.bf16.mxu0 0
        %723 = vmatpush1.bf16.msra.mxu0 %v707
        %724 = vmatprep.subr.bf16.mxu0 0
        %725 = vmatpush1.bf16.msra.mxu0 %v706
        %726 = vmatprep.subr.bf16.mxu0 0
        %727 = vmatpush1.bf16.msra.mxu0 %v705
        %728 = vmatprep.subr.bf16.mxu0 0
        %729 = vmatpush1.bf16.msra.mxu0 %v704
        %730 = vmatprep.subr.bf16.mxu0 0
        %731 = vmatpush1.bf16.msra.mxu0 %v703
        %732 = vmatprep.subr.bf16.mxu0 0
        %733 = vmatpush1.bf16.msra.mxu0 %v702
        %734 = vmatprep.subr.bf16.mxu0 0
        %735 = vmatpush2.bf16.msra.mxu0 0
        %736 = vmatprep.subr.bf16.mxu0 0
        %737 = vmatpush2.bf16.msra.mxu0 0
        %738 = vmatprep.subr.bf16.mxu0 0
        %739 = vmatpush2.bf16.msra.mxu0 0
        %740 = vmatprep.subr.bf16.mxu0 0
        %741 = vmatpush2.bf16.msra.mxu0 0
        %742 = vmatprep.subr.bf16.mxu0 0
        %743 = vmatpush2.bf16.msra.mxu0 0
        %744 = vmatprep.subr.bf16.mxu0 0
        %745 = vmatpush2.bf16.msra.mxu0 0
        %746 = vmatprep.subr.bf16.mxu0 0
        %747 = vmatpush2.bf16.msra.mxu0 0
        %748 = vmatprep.subr.bf16.mxu0 0
        %749 = vmatpush2.bf16.msra.mxu0 0
        %750 = vmatprep.mubr.bf16.mxu0 0
        %751 = vmatmul.mubr.bf16.gmra.mxu0 %v293
        %v752 = vpop.f32.mrf.mxu0
        %v753 = vadd.f32 %v668, %v752
        %v754 = vpop.f32.mrf.mxu0
        %v755 = vpop.f32.mrf.mxu0
        %v756 = vadd.f32 %v668, %v755
        %v757 = vpop.f32.mrf.mxu0
        %758 = vdwg.mxu0
        %v759 = vpack.c.bf16 %v756, %v753
        %v761 = vunpack.c.l.b16 %v759
        %v762 = vunpack.c.h.b16 %v759
        %v763 = vpack.c.b16 %v761, %v761
        %v764 = vpack.c.b16 %v762, %v762
        %s767 = scalar_lea.vmem %s241, 24 [#allocation2]
        %768 = vst.msk [vmem:[%s767] sm:$0xf] %vm392, %v763
        %769 = vst.msk [vmem:[%s767 + $0x4] sm:$0xf] %vm392, %v764
        %v770 = vld [vmem:[%s260] sm:$0xf]
        %v771 = vld [vmem:[%s260 + $0x4] sm:$0xf]
        %s772 = scalar_lea.vmem %s2, 256
        %v773 = vld [vmem:[%s772] sm:$0xf]
        %v774 = vld [vmem:[%s772 + $0x4] sm:$0xf]
        %v775 = vld [vmem:[%s772 + $0x8] sm:$0xf]
        %v776 = vld [vmem:[%s772 + $0xc] sm:$0xf]
        %v777 = vld [vmem:[%s772 + $0x10] sm:$0xf]
        %v778 = vld [vmem:[%s772 + $0x14] sm:$0xf]
        %v779 = vld [vmem:[%s772 + $0x18] sm:$0xf]
        %v780 = vld [vmem:[%s772 + $0x1c] sm:$0xf]
        %v781 = vld [vmem:[%s772 + $0x20] sm:$0xf]
        %v782 = vld [vmem:[%s772 + $0x24] sm:$0xf]
        %v783 = vld [vmem:[%s772 + $0x28] sm:$0xf]
        %v784 = vld [vmem:[%s772 + $0x2c] sm:$0xf]
        %v785 = vld [vmem:[%s772 + $0x30] sm:$0xf]
        %v786 = vld [vmem:[%s772 + $0x34] sm:$0xf]
        %v787 = vld [vmem:[%s772 + $0x38] sm:$0xf]
        %v788 = vld [vmem:[%s772 + $0x3c] sm:$0xf]
        %s789 = scalar_lea.vmem %s3, 4
        %v790 = vld [vmem:[%s789] sm:$0x1]
        %v792 = vlaneseq
        %v793 = vshrl.u32 %v792, 7
        %v794 = vsub.s32 0, %v793
        %v795 = vrot.slane %v790, %v794
        %v799 = vunpack.c.l.b16 %v770
        %v800 = vunpack.c.l.b16 %v771
        %v801 = vpack.c.b16 %v800, %v799
        %v819 = vunpack.c.l.b16 %v773
        %v820 = vunpack.c.l.b16 %v774
        %v821 = vunpack.c.l.b16 %v775
        %v822 = vunpack.c.l.b16 %v776
        %v823 = vunpack.c.l.b16 %v777
        %v824 = vunpack.c.l.b16 %v778
        %v825 = vunpack.c.l.b16 %v779
        %v826 = vunpack.c.l.b16 %v780
        %v827 = vunpack.c.l.b16 %v781
        %v828 = vunpack.c.l.b16 %v782
        %v829 = vunpack.c.l.b16 %v783
        %v830 = vunpack.c.l.b16 %v784
        %v831 = vunpack.c.l.b16 %v785
        %v832 = vunpack.c.l.b16 %v786
        %v833 = vunpack.c.l.b16 %v787
        %v834 = vunpack.c.l.b16 %v788
        %v835 = vpack.c.b16 %v820, %v819
        %v836 = vpack.c.b16 %v822, %v821
        %v837 = vpack.c.b16 %v824, %v823
        %v838 = vpack.c.b16 %v826, %v825
        %v839 = vpack.c.b16 %v828, %v827
        %v840 = vpack.c.b16 %v830, %v829
        %v841 = vpack.c.b16 %v832, %v831
        %v842 = vpack.c.b16 %v834, %v833
        %851 = vmatprep.subr.bf16.mxu0 0
        %852 = vmatpush1.bf16.msra.mxu0 %v842
        %853 = vmatprep.subr.bf16.mxu0 0
        %854 = vmatpush1.bf16.msra.mxu0 %v841
        %855 = vmatprep.subr.bf16.mxu0 0
        %856 = vmatpush1.bf16.msra.mxu0 %v840
        %857 = vmatprep.subr.bf16.mxu0 0
        %858 = vmatpush1.bf16.msra.mxu0 %v839
        %859 = vmatprep.subr.bf16.mxu0 0
        %860 = vmatpush1.bf16.msra.mxu0 %v838
        %861 = vmatprep.subr.bf16.mxu0 0
        %862 = vmatpush1.bf16.msra.mxu0 %v837
        %863 = vmatprep.subr.bf16.mxu0 0
        %864 = vmatpush1.bf16.msra.mxu0 %v836
        %865 = vmatprep.subr.bf16.mxu0 0
        %866 = vmatpush1.bf16.msra.mxu0 %v835
        %867 = vmatprep.subr.bf16.mxu0 0
        %868 = vmatpush2.bf16.msra.mxu0 0
        %869 = vmatprep.subr.bf16.mxu0 0
        %870 = vmatpush2.bf16.msra.mxu0 0
        %871 = vmatprep.subr.bf16.mxu0 0
        %872 = vmatpush2.bf16.msra.mxu0 0
        %873 = vmatprep.subr.bf16.mxu0 0
        %874 = vmatpush2.bf16.msra.mxu0 0
        %875 = vmatprep.subr.bf16.mxu0 0
        %876 = vmatpush2.bf16.msra.mxu0 0
        %877 = vmatprep.subr.bf16.mxu0 0
        %878 = vmatpush2.bf16.msra.mxu0 0
        %879 = vmatprep.subr.bf16.mxu0 0
        %880 = vmatpush2.bf16.msra.mxu0 0
        %881 = vmatprep.subr.bf16.mxu0 0
        %882 = vmatpush2.bf16.msra.mxu0 0
        %883 = vmatprep.mubr.bf16.mxu0 0
        %884 = vmatmul.mubr.bf16.gmra.mxu0 %v801
        %v885 = vpop.f32.mrf.mxu0
        %v886 = vadd.f32 %v795, %v885
        %v887 = vpop.f32.mrf.mxu0
        %v888 = vpop.f32.mrf.mxu0
        %v889 = vadd.f32 %v795, %v888
        %v890 = vpop.f32.mrf.mxu0
        %891 = vdwg.mxu0
        %v892 = vpack.c.bf16 %v889, %v886
        %v894 = vunpack.c.l.b16 %v892
        %v895 = vunpack.c.h.b16 %v892
        %v896 = vpack.c.b16 %v894, %v894
        %v897 = vpack.c.b16 %v895, %v895
        %s900 = scalar_lea.vmem %s241, 32 [#allocation2]
        %901 = vst.msk [vmem:[%s900] sm:$0xf] %vm392, %v896
        %902 = vst.msk [vmem:[%s900 + $0x4] sm:$0xf] %vm392, %v897
        %s903 = scalar_lea.vmem %s2, 320
        %v904 = vld [vmem:[%s903] sm:$0xf]
        %v905 = vld [vmem:[%s903 + $0x4] sm:$0xf]
        %v906 = vld [vmem:[%s903 + $0x8] sm:$0xf]
        %v907 = vld [vmem:[%s903 + $0xc] sm:$0xf]
        %v908 = vld [vmem:[%s903 + $0x10] sm:$0xf]
        %v909 = vld [vmem:[%s903 + $0x14] sm:$0xf]
        %v910 = vld [vmem:[%s903 + $0x18] sm:$0xf]
        %v911 = vld [vmem:[%s903 + $0x1c] sm:$0xf]
        %v912 = vld [vmem:[%s903 + $0x20] sm:$0xf]
        %v913 = vld [vmem:[%s903 + $0x24] sm:$0xf]
        %v914 = vld [vmem:[%s903 + $0x28] sm:$0xf]
        %v915 = vld [vmem:[%s903 + $0x2c] sm:$0xf]
        %v916 = vld [vmem:[%s903 + $0x30] sm:$0xf]
        %v917 = vld [vmem:[%s903 + $0x34] sm:$0xf]
        %v918 = vld [vmem:[%s903 + $0x38] sm:$0xf]
        %v919 = vld [vmem:[%s903 + $0x3c] sm:$0xf]
        %s920 = scalar_lea.vmem %s3, 5
        %v921 = vld [vmem:[%s920] sm:$0x1]
        %v923 = vlaneseq
        %v924 = vshrl.u32 %v923, 7
        %v925 = vsub.s32 0, %v924
        %v926 = vrot.slane %v921, %v925
        %v944 = vunpack.c.l.b16 %v904
        %v945 = vunpack.c.l.b16 %v905
        %v946 = vunpack.c.l.b16 %v906
        %v947 = vunpack.c.l.b16 %v907
        %v948 = vunpack.c.l.b16 %v908
        %v949 = vunpack.c.l.b16 %v909
        %v950 = vunpack.c.l.b16 %v910
        %v951 = vunpack.c.l.b16 %v911
        %v952 = vunpack.c.l.b16 %v912
        %v953 = vunpack.c.l.b16 %v913
        %v954 = vunpack.c.l.b16 %v914
        %v955 = vunpack.c.l.b16 %v915
        %v956 = vunpack.c.l.b16 %v916
        %v957 = vunpack.c.l.b16 %v917
        %v958 = vunpack.c.l.b16 %v918
        %v959 = vunpack.c.l.b16 %v919
        %v960 = vpack.c.b16 %v945, %v944
        %v961 = vpack.c.b16 %v947, %v946
        %v962 = vpack.c.b16 %v949, %v948
        %v963 = vpack.c.b16 %v951, %v950
        %v964 = vpack.c.b16 %v953, %v952
        %v965 = vpack.c.b16 %v955, %v954
        %v966 = vpack.c.b16 %v957, %v956
        %v967 = vpack.c.b16 %v959, %v958
        %976 = vmatprep.subr.bf16.mxu0 0
        %977 = vmatpush1.bf16.msra.mxu0 %v967
        %978 = vmatprep.subr.bf16.mxu0 0
        %979 = vmatpush1.bf16.msra.mxu0 %v966
        %980 = vmatprep.subr.bf16.mxu0 0
        %981 = vmatpush1.bf16.msra.mxu0 %v965
        %982 = vmatprep.subr.bf16.mxu0 0
        %983 = vmatpush1.bf16.msra.mxu0 %v964
        %984 = vmatprep.subr.bf16.mxu0 0
        %985 = vmatpush1.bf16.msra.mxu0 %v963
        %986 = vmatprep.subr.bf16.mxu0 0
        %987 = vmatpush1.bf16.msra.mxu0 %v962
        %988 = vmatprep.subr.bf16.mxu0 0
        %989 = vmatpush1.bf16.msra.mxu0 %v961
        %990 = vmatprep.subr.bf16.mxu0 0
        %991 = vmatpush1.bf16.msra.mxu0 %v960
        %992 = vmatprep.subr.bf16.mxu0 0
        %993 = vmatpush2.bf16.msra.mxu0 0
        %994 = vmatprep.subr.bf16.mxu0 0
        %995 = vmatpush2.bf16.msra.mxu0 0
        %996 = vmatprep.subr.bf16.mxu0 0
        %997 = vmatpush2.bf16.msra.mxu0 0
        %998 = vmatprep.subr.bf16.mxu0 0
        %999 = vmatpush2.bf16.msra.mxu0 0
        %1000 = vmatprep.subr.bf16.mxu0 0
        %1001 = vmatpush2.bf16.msra.mxu0 0
        %1002 = vmatprep.subr.bf16.mxu0 0
        %1003 = vmatpush2.bf16.msra.mxu0 0
        %1004 = vmatprep.subr.bf16.mxu0 0
        %1005 = vmatpush2.bf16.msra.mxu0 0
        %1006 = vmatprep.subr.bf16.mxu0 0
        %1007 = vmatpush2.bf16.msra.mxu0 0
        %1008 = vmatprep.mubr.bf16.mxu0 0
        %1009 = vmatmul.mubr.bf16.gmra.mxu0 %v801
        %v1010 = vpop.f32.mrf.mxu0
        %v1011 = vadd.f32 %v926, %v1010
        %v1012 = vpop.f32.mrf.mxu0
        %v1013 = vpop.f32.mrf.mxu0
        %v1014 = vadd.f32 %v926, %v1013
        %v1015 = vpop.f32.mrf.mxu0
        %1016 = vdwg.mxu0
        %v1017 = vpack.c.bf16 %v1014, %v1011
        %v1019 = vunpack.c.l.b16 %v1017
        %v1020 = vunpack.c.h.b16 %v1017
        %v1021 = vpack.c.b16 %v1019, %v1019
        %v1022 = vpack.c.b16 %v1020, %v1020
        %s1025 = scalar_lea.vmem %s241, 40 [#allocation2]
        %1026 = vst.msk [vmem:[%s1025] sm:$0xf] %vm392, %v1021
        %1027 = vst.msk [vmem:[%s1025 + $0x4] sm:$0xf] %vm392, %v1022
        %s1028 = scalar_lea.vmem %s2, 384
        %v1029 = vld [vmem:[%s1028] sm:$0xf]
        %v1030 = vld [vmem:[%s1028 + $0x4] sm:$0xf]
        %v1031 = vld [vmem:[%s1028 + $0x8] sm:$0xf]
        %v1032 = vld [vmem:[%s1028 + $0xc] sm:$0xf]
        %v1033 = vld [vmem:[%s1028 + $0x10] sm:$0xf]
        %v1034 = vld [vmem:[%s1028 + $0x14] sm:$0xf]
        %v1035 = vld [vmem:[%s1028 + $0x18] sm:$0xf]
        %v1036 = vld [vmem:[%s1028 + $0x1c] sm:$0xf]
        %v1037 = vld [vmem:[%s1028 + $0x20] sm:$0xf]
        %v1038 = vld [vmem:[%s1028 + $0x24] sm:$0xf]
        %v1039 = vld [vmem:[%s1028 + $0x28] sm:$0xf]
        %v1040 = vld [vmem:[%s1028 + $0x2c] sm:$0xf]
        %v1041 = vld [vmem:[%s1028 + $0x30] sm:$0xf]
        %v1042 = vld [vmem:[%s1028 + $0x34] sm:$0xf]
        %v1043 = vld [vmem:[%s1028 + $0x38] sm:$0xf]
        %v1044 = vld [vmem:[%s1028 + $0x3c] sm:$0xf]
        %s1045 = scalar_lea.vmem %s3, 6
        %v1046 = vld [vmem:[%s1045] sm:$0x1]
        %v1048 = vlaneseq
        %v1049 = vshrl.u32 %v1048, 7
        %v1050 = vsub.s32 0, %v1049
        %v1051 = vrot.slane %v1046, %v1050
        %v1069 = vunpack.c.l.b16 %v1029
        %v1070 = vunpack.c.l.b16 %v1030
        %v1071 = vunpack.c.l.b16 %v1031
        %v1072 = vunpack.c.l.b16 %v1032
        %v1073 = vunpack.c.l.b16 %v1033
        %v1074 = vunpack.c.l.b16 %v1034
        %v1075 = vunpack.c.l.b16 %v1035
        %v1076 = vunpack.c.l.b16 %v1036
        %v1077 = vunpack.c.l.b16 %v1037
        %v1078 = vunpack.c.l.b16 %v1038
        %v1079 = vunpack.c.l.b16 %v1039
        %v1080 = vunpack.c.l.b16 %v1040
        %v1081 = vunpack.c.l.b16 %v1041
        %v1082 = vunpack.c.l.b16 %v1042
        %v1083 = vunpack.c.l.b16 %v1043
        %v1084 = vunpack.c.l.b16 %v1044
        %v1085 = vpack.c.b16 %v1070, %v1069
        %v1086 = vpack.c.b16 %v1072, %v1071
        %v1087 = vpack.c.b16 %v1074, %v1073
        %v1088 = vpack.c.b16 %v1076, %v1075
        %v1089 = vpack.c.b16 %v1078, %v1077
        %v1090 = vpack.c.b16 %v1080, %v1079
        %v1091 = vpack.c.b16 %v1082, %v1081
        %v1092 = vpack.c.b16 %v1084, %v1083
        %1101 = vmatprep.subr.bf16.mxu0 0
        %1102 = vmatpush1.bf16.msra.mxu0 %v1092
        %1103 = vmatprep.subr.bf16.mxu0 0
        %1104 = vmatpush1.bf16.msra.mxu0 %v1091
        %1105 = vmatprep.subr.bf16.mxu0 0
        %1106 = vmatpush1.bf16.msra.mxu0 %v1090
        %1107 = vmatprep.subr.bf16.mxu0 0
        %1108 = vmatpush1.bf16.msra.mxu0 %v1089
        %1109 = vmatprep.subr.bf16.mxu0 0
        %1110 = vmatpush1.bf16.msra.mxu0 %v1088
        %1111 = vmatprep.subr.bf16.mxu0 0
        %1112 = vmatpush1.bf16.msra.mxu0 %v1087
        %1113 = vmatprep.subr.bf16.mxu0 0
        %1114 = vmatpush1.bf16.msra.mxu0 %v1086
        %1115 = vmatprep.subr.bf16.mxu0 0
        %1116 = vmatpush1.bf16.msra.mxu0 %v1085
        %1117 = vmatprep.subr.bf16.mxu0 0
        %1118 = vmatpush2.bf16.msra.mxu0 0
        %1119 = vmatprep.subr.bf16.mxu0 0
        %1120 = vmatpush2.bf16.msra.mxu0 0
        %1121 = vmatprep.subr.bf16.mxu0 0
        %1122 = vmatpush2.bf16.msra.mxu0 0
        %1123 = vmatprep.subr.bf16.mxu0 0
        %1124 = vmatpush2.bf16.msra.mxu0 0
        %1125 = vmatprep.subr.bf16.mxu0 0
        %1126 = vmatpush2.bf16.msra.mxu0 0
        %1127 = vmatprep.subr.bf16.mxu0 0
        %1128 = vmatpush2.bf16.msra.mxu0 0
        %1129 = vmatprep.subr.bf16.mxu0 0
        %1130 = vmatpush2.bf16.msra.mxu0 0
        %1131 = vmatprep.subr.bf16.mxu0 0
        %1132 = vmatpush2.bf16.msra.mxu0 0
        %1133 = vmatprep.mubr.bf16.mxu0 0
        %1134 = vmatmul.mubr.bf16.gmra.mxu0 %v801
        %v1135 = vpop.f32.mrf.mxu0
        %v1136 = vadd.f32 %v1051, %v1135
        %v1137 = vpop.f32.mrf.mxu0
        %v1138 = vpop.f32.mrf.mxu0
        %v1139 = vadd.f32 %v1051, %v1138
        %v1140 = vpop.f32.mrf.mxu0
        %1141 = vdwg.mxu0
        %v1142 = vpack.c.bf16 %v1139, %v1136
        %v1144 = vunpack.c.l.b16 %v1142
        %v1145 = vunpack.c.h.b16 %v1142
        %v1146 = vpack.c.b16 %v1144, %v1144
        %v1147 = vpack.c.b16 %v1145, %v1145
        %s1150 = scalar_lea.vmem %s241, 48 [#allocation2]
        %1151 = vst.msk [vmem:[%s1150] sm:$0xf] %vm392, %v1146
        %1152 = vst.msk [vmem:[%s1150 + $0x4] sm:$0xf] %vm392, %v1147
        %s1153 = scalar_lea.vmem %s2, 448
        %v1154 = vld [vmem:[%s1153] sm:$0xf]
        %v1155 = vld [vmem:[%s1153 + $0x4] sm:$0xf]
        %v1156 = vld [vmem:[%s1153 + $0x8] sm:$0xf]
        %v1157 = vld [vmem:[%s1153 + $0xc] sm:$0xf]
        %v1158 = vld [vmem:[%s1153 + $0x10] sm:$0xf]
        %v1159 = vld [vmem:[%s1153 + $0x14] sm:$0xf]
        %v1160 = vld [vmem:[%s1153 + $0x18] sm:$0xf]
        %v1161 = vld [vmem:[%s1153 + $0x1c] sm:$0xf]
        %v1162 = vld [vmem:[%s1153 + $0x20] sm:$0xf]
        %v1163 = vld [vmem:[%s1153 + $0x24] sm:$0xf]
        %v1164 = vld [vmem:[%s1153 + $0x28] sm:$0xf]
        %v1165 = vld [vmem:[%s1153 + $0x2c] sm:$0xf]
        %v1166 = vld [vmem:[%s1153 + $0x30] sm:$0xf]
        %v1167 = vld [vmem:[%s1153 + $0x34] sm:$0xf]
        %v1168 = vld [vmem:[%s1153 + $0x38] sm:$0xf]
        %v1169 = vld [vmem:[%s1153 + $0x3c] sm:$0xf]
        %s1170 = scalar_lea.vmem %s3, 7
        %v1171 = vld [vmem:[%s1170] sm:$0x1]
        %v1173 = vlaneseq
        %v1174 = vshrl.u32 %v1173, 7
        %v1175 = vsub.s32 0, %v1174
        %v1176 = vrot.slane %v1171, %v1175
        %v1194 = vunpack.c.l.b16 %v1154
        %v1195 = vunpack.c.l.b16 %v1155
        %v1196 = vunpack.c.l.b16 %v1156
        %v1197 = vunpack.c.l.b16 %v1157
        %v1198 = vunpack.c.l.b16 %v1158
        %v1199 = vunpack.c.l.b16 %v1159
        %v1200 = vunpack.c.l.b16 %v1160
        %v1201 = vunpack.c.l.b16 %v1161
        %v1202 = vunpack.c.l.b16 %v1162
        %v1203 = vunpack.c.l.b16 %v1163
        %v1204 = vunpack.c.l.b16 %v1164
        %v1205 = vunpack.c.l.b16 %v1165
        %v1206 = vunpack.c.l.b16 %v1166
        %v1207 = vunpack.c.l.b16 %v1167
        %v1208 = vunpack.c.l.b16 %v1168
        %v1209 = vunpack.c.l.b16 %v1169
        %v1210 = vpack.c.b16 %v1195, %v1194
        %v1211 = vpack.c.b16 %v1197, %v1196
        %v1212 = vpack.c.b16 %v1199, %v1198
        %v1213 = vpack.c.b16 %v1201, %v1200
        %v1214 = vpack.c.b16 %v1203, %v1202
        %v1215 = vpack.c.b16 %v1205, %v1204
        %v1216 = vpack.c.b16 %v1207, %v1206
        %v1217 = vpack.c.b16 %v1209, %v1208
        %1226 = vmatprep.subr.bf16.mxu0 0
        %1227 = vmatpush1.bf16.msra.mxu0 %v1217
        %1228 = vmatprep.subr.bf16.mxu0 0
        %1229 = vmatpush1.bf16.msra.mxu0 %v1216
        %1230 = vmatprep.subr.bf16.mxu0 0
        %1231 = vmatpush1.bf16.msra.mxu0 %v1215
        %1232 = vmatprep.subr.bf16.mxu0 0
        %1233 = vmatpush1.bf16.msra.mxu0 %v1214
        %1234 = vmatprep.subr.bf16.mxu0 0
        %1235 = vmatpush1.bf16.msra.mxu0 %v1213
        %1236 = vmatprep.subr.bf16.mxu0 0
        %1237 = vmatpush1.bf16.msra.mxu0 %v1212
        %1238 = vmatprep.subr.bf16.mxu0 0
        %1239 = vmatpush1.bf16.msra.mxu0 %v1211
        %1240 = vmatprep.subr.bf16.mxu0 0
        %1241 = vmatpush1.bf16.msra.mxu0 %v1210
        %1242 = vmatprep.subr.bf16.mxu0 0
        %1243 = vmatpush2.bf16.msra.mxu0 0
        %1244 = vmatprep.subr.bf16.mxu0 0
        %1245 = vmatpush2.bf16.msra.mxu0 0
        %1246 = vmatprep.subr.bf16.mxu0 0
        %1247 = vmatpush2.bf16.msra.mxu0 0
        %1248 = vmatprep.subr.bf16.mxu0 0
        %1249 = vmatpush2.bf16.msra.mxu0 0
        %1250 = vmatprep.subr.bf16.mxu0 0
        %1251 = vmatpush2.bf16.msra.mxu0 0
        %1252 = vmatprep.subr.bf16.mxu0 0
        %1253 = vmatpush2.bf16.msra.mxu0 0
        %1254 = vmatprep.subr.bf16.mxu0 0
        %1255 = vmatpush2.bf16.msra.mxu0 0
        %1256 = vmatprep.subr.bf16.mxu0 0
        %1257 = vmatpush2.bf16.msra.mxu0 0
        %1258 = vmatprep.mubr.bf16.mxu0 0
        %1259 = vmatmul.mubr.bf16.gmra.mxu0 %v801
        %v1260 = vpop.f32.mrf.mxu0
        %v1261 = vadd.f32 %v1176, %v1260
        %v1262 = vpop.f32.mrf.mxu0
        %v1263 = vpop.f32.mrf.mxu0
        %v1264 = vadd.f32 %v1176, %v1263
        %v1265 = vpop.f32.mrf.mxu0
        %1266 = vdwg.mxu0
        %v1267 = vpack.c.bf16 %v1264, %v1261
        %v1269 = vunpack.c.l.b16 %v1267
        %v1270 = vunpack.c.h.b16 %v1267
        %v1271 = vpack.c.b16 %v1269, %v1269
        %v1272 = vpack.c.b16 %v1270, %v1270
        %s1275 = scalar_lea.vmem %s241, 56 [#allocation2]
        %1276 = vst.msk [vmem:[%s1275] sm:$0xf] %vm392, %v1271
        %1277 = vst.msk [vmem:[%s1275 + $0x4] sm:$0xf] %vm392, %v1272
        %s1278 = sand.u32 %s138, 1
        %s1279 = scalar_lea.sflag [#allocation3], %s1278
        %s1280 = sand.u32 %s138, 1
        %s1281 = smul.addr %s1280, 64
        %s1282 = scalar_lea.vmem [#allocation2], %s1281
        // Predicated region
        $region37: #{tpu_custom_call.1} parent=35 // pred_check
          %p1283 = pneg %p148
        $region38: #{tpu_custom_call.1} parent=35 // pred_check_branch
          %1285 = sbr.rel (%p1283) target = $region40
        $region39: #{tpu_custom_call.1} parent=35 // pred_region
          #allocation5 [shape = 'u32[6]{0}', space=smem, size = 0x18, scoped, tag = 'DMA stride descriptor']
          %s1286 = smul.u32 2, %s23
          %s1288 = ssub.s32 1024, 1024
          %1289 = vsyncadd %s1279, %s1288
          %s1290 = smul.addr %s22, 8
          %s1291 = sadd.s32 %s1286, %s1290
          %s1292 = smul.addr %s1291, 64
          %s1293 = scalar_lea.hbm %s4, %s1292
          %s1295 = sshll.u32 1, 14
          %s1296 = sxor.u32 4294967295, %s1295
          %s1299 = sshll.u32 7, 18
          %s1300 = sxor.u32 4294967295, %s1299
          %s1301 = sand.u32 0, %s1300
          %s1303 = sor.u32 %s1301, 0
          %s1304 = sshll.u32 %s1282, 4
          %s1305 = int_to_ptr.vmem [resolvable:$true] %s1304
          %1311 = sst [smem:[#allocation5]] 512
          %s1312 = scalar_lea.smem [#allocation5], 1
          %1313 = sst [smem:[%s1312]] 1024
          %s1314 = scalar_lea.smem [#allocation5], 2
          %1315 = sst [smem:[%s1314]] 8
          %s1316 = scalar_lea.smem [#allocation5], 3
          %1317 = sst [smem:[%s1316]] 64
          %s1318 = scalar_lea.smem [#allocation5], 4
          %1319 = sst [smem:[%s1318]] 64
          %s1320 = scalar_lea.smem [#allocation5], 5
          %1321 = sst [smem:[%s1320]] 4
          %1323 = dma.general %s1305, 1024, %s1293, %s1279, 131072, [#allocation5], %s1303, 0
        $region40: #{tpu_custom_call.1} parent=35 // pred_fallthru
          _
      $region36: #{tpu_custom_call.1} parent=5 // pred_fallthru
        _
      %p1324 = scmp.le.s32.totalorder 2, %s13
      // Predicated region
      $region41: #{tpu_custom_call.1} parent=5 // pred_check
        %p1325 = pneg %p1324
      $region42: #{tpu_custom_call.1} parent=5 // pred_check_branch
        %1327 = sbr.rel (%p1325) target = $region44
      $region43: #{tpu_custom_call.1} parent=5 // pred_region
        %s1328 = ssub.s32 %s13, 2
        // Predicated region
        $region45: #{tpu_custom_call.1} parent=43 // pred_check
          %p1329 = pneg %p154
        $region46: #{tpu_custom_call.1} parent=43 // pred_check_branch
          %1331 = sbr.rel (%p1329) target = $region48
        $region47: #{tpu_custom_call.1} parent=43 // pred_region
          %s1332 = sand.u32 %s139, 1
          %s1333 = scalar_lea.sflag [#allocation3], %s1332
          %s1334 = sand.u32 %s139, 1
          %s1335 = smul.addr %s1334, 64
          %s1336 = scalar_lea.vmem [#allocation2], %s1335
          %1337 = dma.done %s1333, 1024
        $region48: #{tpu_custom_call.1} parent=43 // pred_fallthru
          _
      $region44: #{tpu_custom_call.1} parent=5 // pred_fallthru
        _
    $region6: #{tpu_custom_call.1} parent=1 // loop_footer
      %s17 = sadd.s32 1, %s13
    $region7: #{tpu_custom_call.1} parent=1 // loop_footer_branch
      %12 = sbr.rel target = $region3
    $region8: #{tpu_custom_call.1} parent=1 // loop_exit
      _
    %1338 = vsyncpa [#allocation3], 1
    %s1339 = scalar_lea.sflag [#allocation3], 1
    %1340 = vsyncpa %s1339, 1

</llo_original>
